<compile_context>
chip_gen: v5e
topology: v5e:2x2
jax: 0.10.0
libtpu: 0.0.40
codegen_flags: <defaults>
</compile_context>

<pallas_src>
import math
import functools
import jax
import jax.numpy as jnp
from jax import lax
from jax.experimental import pallas as pl
from jax.experimental.pallas import tpu as pltpu

# ---------------- model hyper-parameters (Transformer defaults) ----------------
NUM_LAYERS = 2
HIDDEN = 32
INTERMEDIATE = 4 * HIDDEN          # 128
HEAD_SIZE = HIDDEN // 4            # 8
NUM_HEADS = HIDDEN // HEAD_SIZE    # 4
LN_EPS = 1e-5
MASK_VALUE = -1e7

BATCH = 2
SEQ = 8


# ---------------- in-kernel helpers ----------------
def _layer_norm(x, gamma, beta):
    # PyTorch nn.LayerNorm: biased variance over last dim, eps inside sqrt.
    mean = jnp.mean(x, axis=-1, keepdims=True)
    xc = x - mean
    var = jnp.mean(xc * xc, axis=-1, keepdims=True)
    inv = lax.rsqrt(var + LN_EPS)
    return xc * inv * gamma + beta


def _gelu_exact(x):
    # PyTorch nn.GELU() default = exact erf form.
    return 0.5 * x * (1.0 + lax.erf(x * (1.0 / math.sqrt(2.0))))


# ---------------- fused whole-model kernel (all layers, all batches) ----------------
def transformer_kernel(
    x_ref, mask_ref,
    wq_ref, bq_ref, wk_ref, bk_ref, wv_ref, bv_ref,
    wo_ref, bo_ref, ln1g_ref, ln1b_ref,
    wi_ref, bi_ref, wd_ref, bd_ref, ln2g_ref, ln2b_ref,
    out_ref,
):
    h = x_ref[...]            # (B*L, H) float32 — resident across both layers
    add_mask = mask_ref[...]  # (B*L, B*L) additive mask: key-pos mask + cross-batch block mask

    for layer in range(NUM_LAYERS):            # static unroll, NUM_LAYERS == 2
        wq = wq_ref[layer]; bq = bq_ref[layer]
        wk = wk_ref[layer]; bk = bk_ref[layer]
        wv = wv_ref[layer]; bv = bv_ref[layer]
        wo = wo_ref[layer]; bo = bo_ref[layer]
        ln1g = ln1g_ref[layer]; ln1b = ln1b_ref[layer]
        wi = wi_ref[layer]; bi = bi_ref[layer]
        wd = wd_ref[layer]; bd = bd_ref[layer]
        ln2g = ln2g_ref[layer]; ln2b = ln2b_ref[layer]

        # --- Q, K, V projections (single MXU matmul each, all batches at once) ---
        q = jnp.dot(h, wq, preferred_element_type=jnp.float32) + bq
        k = jnp.dot(h, wk, preferred_element_type=jnp.float32) + bk
        v = jnp.dot(h, wv, preferred_element_type=jnp.float32) + bv

        # --- per-head attention over the full (B*L) key axis ---
        # Cross-batch pairs carry -1e7 in add_mask -> exp underflows to exactly 0,
        # so this is numerically identical to per-batch softmax over L keys.
        acc = None
        for hh in range(NUM_HEADS):            # static unroll, 4 heads
            lo = hh * HEAD_SIZE
            hi = lo + HEAD_SIZE
            qh = q[:, lo:hi]                   # (N, d)
            kh = k[:, lo:hi]                   # (N, d)
            vh = v[:, lo:hi]                   # (N, d)
            # scores without an explicit transpose (contract last dims directly)
            s = lax.dot_general(qh, kh, (((1,), (1,)), ((), ())),
                                preferred_element_type=jnp.float32)   # (N, N)
            s = s * 0.25 + add_mask            # /4.0 as in the PyTorch reference
            m = jnp.max(s, axis=-1, keepdims=True)
            e = jnp.exp(s - m)
            denom = jnp.sum(e, axis=-1, keepdims=True)
            p = e * pl.reciprocal(denom, approx=True)                 # EUP reciprocal
            ctx_h = jnp.dot(p, vh, preferred_element_type=jnp.float32)   # (N, d)
            # fold head-concat + output projection into a per-head partial product
            contrib = jnp.dot(ctx_h, wo[lo:hi, :],
                              preferred_element_type=jnp.float32)        # (N, H)
            acc = contrib if acc is None else acc + contrib

        attn_out = acc + bo
        h = _layer_norm(attn_out + h, ln1g, ln1b)

        # --- MLP: intermediate (exact GELU) + output + residual + LayerNorm ---
        inter = _gelu_exact(jnp.dot(h, wi, preferred_element_type=jnp.float32) + bi)
        mlp_out = jnp.dot(inter, wd, preferred_element_type=jnp.float32) + bd
        h = _layer_norm(mlp_out + h, ln2g, ln2b)

    out_ref[...] = h
    # TODO(synk): output last dim is H=32 (<128 lanes); a lane-dense (1, B*L*H)
    # out layout would need an in-kernel (16,32)->(1,512) relayout — skipped to
    # keep lowering simple at this toy size.


# ---------------- wrapper ----------------
def _vmem_spec():
    return pl.BlockSpec(memory_space=pltpu.MemorySpace.VMEM)


def transformer_forward(x, attention_mask, params, reduction="top"):
    """x: (B, L, H) f32. attention_mask: (B, L) of 0/1."""
    B, L, H = x.shape
    N = B * L

    # Additive key-position mask (matches PyTorch (1 - m[:,None,None,:]) * -1e7),
    # plus a block-diagonal batch-isolation mask so one (N, N) score matrix per
    # head covers all batches at once.
    key_add = ((1.0 - attention_mask) * MASK_VALUE).astype(jnp.float32).reshape(N)  # (N,)
    batch_ids = jnp.repeat(jnp.arange(B, dtype=jnp.int32), L)                        # (N,)
    same_batch = batch_ids[:, None] == batch_ids[None, :]                            # (N, N)
    full_mask = jnp.where(same_batch, key_add[None, :],
                          jnp.float32(MASK_VALUE)).astype(jnp.float32)               # (N, N)

    x2 = x.reshape(N, H).astype(jnp.float32)

    n_inputs = 18
    out2 = pl.pallas_call(
        transformer_kernel,
        out_shape=jax.ShapeDtypeStruct((N, H), jnp.float32),
        in_specs=[_vmem_spec() for _ in range(n_inputs)],
        out_specs=_vmem_spec(),
    )(
        x2, full_mask,
        params["wq"], params["bq"], params["wk"], params["bk"],
        params["wv"], params["bv"], params["wo"], params["bo"],
        params["ln1_g"], params["ln1_b"],
        params["wi"], params["bi"], params["wd"], params["bd"],
        params["ln2_g"], params["ln2_b"],
    )
    h_out = out2.reshape(B, L, H)

    if reduction == "top":
        return h_out[:, 0, :]
    elif reduction == "mean":
        return jnp.mean(h_out, axis=1)
    elif reduction is None:
        return (jnp.mean(h_out, axis=1), h_out)
    else:
        raise RuntimeError(f"cannot recognize reduction: {reduction}")
    # TODO(synk): structure_matrix branch (extra einsum bias terms) not implemented;
    # this script exercises the structure_matrix=None path only.


# ---------------- parameter init (deterministic, synthetic, layer-stacked) ----------------
def init_params(key):
    ks = jax.random.split(key, 12)
    scale = 0.05
    f32 = jnp.float32
    NL = NUM_LAYERS

    def w(k, shape):
        return (scale * jax.random.normal(k, (NL,) + shape)).astype(f32)

    return {
        "wq": w(ks[0], (HIDDEN, HIDDEN)),   "bq": w(ks[1], (1, HIDDEN)),
        "wk": w(ks[2], (HIDDEN, HIDDEN)),   "bk": w(ks[3], (1, HIDDEN)),
        "wv": w(ks[4], (HIDDEN, HIDDEN)),   "bv": w(ks[5], (1, HIDDEN)),
        "wo": w(ks[6], (HIDDEN, HIDDEN)),   "bo": w(ks[7], (1, HIDDEN)),
        # LayerNorm affine params: PyTorch default init (ones / zeros)
        "ln1_g": jnp.ones((NL, 1, HIDDEN), f32),
        "ln1_b": jnp.zeros((NL, 1, HIDDEN), f32),
        "wi": w(ks[8], (HIDDEN, INTERMEDIATE)), "bi": w(ks[9], (1, INTERMEDIATE)),
        "wd": w(ks[10], (INTERMEDIATE, HIDDEN)), "bd": w(ks[11], (1, HIDDEN)),
        "ln2_g": jnp.ones((NL, 1, HIDDEN), f32),
        "ln2_b": jnp.zeros((NL, 1, HIDDEN), f32),
    }


if __name__ == "__main__":
    key = jax.random.PRNGKey(0)
    k_x, k_p = jax.random.split(key)

    x = jax.random.normal(k_x, (BATCH, SEQ, HIDDEN), dtype=jnp.float32)
    attention_mask = jnp.ones((BATCH, SEQ), dtype=jnp.float32)
    attention_mask = attention_mask.at[:, -2:].set(0.0)  # mask out the last 2 key positions

    params = init_params(k_p)

    fwd = jax.jit(functools.partial(transformer_forward, reduction="top"))
    out = fwd(x, attention_mask, params)
    out = jax.block_until_ready(out)

    assert out.shape == (BATCH, HIDDEN)
    assert bool(jnp.all(jnp.isfinite(out)))
    print("KERNEL_OK")
</pallas_src>

<mosaic_0001>
module attributes {stable_mosaic.version = 11 : i64} {
  func.func @transformer_kernel(%arg0: memref<16x32xf32, #tpu.memory_space<vmem>>, %arg1: memref<16x16xf32, #tpu.memory_space<vmem>>, %arg2: memref<2x32x32xf32, #tpu.memory_space<vmem>>, %arg3: memref<2x1x32xf32, #tpu.memory_space<vmem>>, %arg4: memref<2x32x32xf32, #tpu.memory_space<vmem>>, %arg5: memref<2x1x32xf32, #tpu.memory_space<vmem>>, %arg6: memref<2x32x32xf32, #tpu.memory_space<vmem>>, %arg7: memref<2x1x32xf32, #tpu.memory_space<vmem>>, %arg8: memref<2x32x32xf32, #tpu.memory_space<vmem>>, %arg9: memref<2x1x32xf32, #tpu.memory_space<vmem>>, %arg10: memref<2x1x32xf32, #tpu.memory_space<vmem>>, %arg11: memref<2x1x32xf32, #tpu.memory_space<vmem>>, %arg12: memref<2x32x128xf32, #tpu.memory_space<vmem>>, %arg13: memref<2x1x128xf32, #tpu.memory_space<vmem>>, %arg14: memref<2x128x32xf32, #tpu.memory_space<vmem>>, %arg15: memref<2x1x32xf32, #tpu.memory_space<vmem>>, %arg16: memref<2x1x32xf32, #tpu.memory_space<vmem>>, %arg17: memref<2x1x32xf32, #tpu.memory_space<vmem>>, %arg18: memref<16x32xf32, #tpu.memory_space<vmem>>) attributes {dimension_semantics = [], scalar_prefetch = 0 : i64, scratch_operands = 0 : i64, tpu.core_type = #tpu.core_type<tc>} {
    %c0 = arith.constant 0 : index
    %c0_0 = arith.constant 0 : index
    %0 = vector.load %arg0[%c0, %c0_0] : memref<16x32xf32, #tpu.memory_space<vmem>>, vector<16x32xf32>
    %c0_1 = arith.constant 0 : index
    %c0_2 = arith.constant 0 : index
    %1 = vector.load %arg1[%c0_1, %c0_2] : memref<16x16xf32, #tpu.memory_space<vmem>>, vector<16x16xf32>
    %c0_3 = arith.constant 0 : index
    %c0_4 = arith.constant 0 : index
    %c0_5 = arith.constant 0 : index
    %2 = vector.load %arg2[%c0_3, %c0_4, %c0_5] : memref<2x32x32xf32, #tpu.memory_space<vmem>>, vector<1x32x32xf32>
    %3 = vector.shape_cast %2 : vector<1x32x32xf32> to vector<32x32xf32>
    %c0_6 = arith.constant 0 : index
    %c0_7 = arith.constant 0 : index
    %c0_8 = arith.constant 0 : index
    %4 = vector.load %arg3[%c0_6, %c0_7, %c0_8] : memref<2x1x32xf32, #tpu.memory_space<vmem>>, vector<1x1x32xf32>
    %5 = vector.shape_cast %4 : vector<1x1x32xf32> to vector<1x32xf32>
    %c0_9 = arith.constant 0 : index
    %c0_10 = arith.constant 0 : index
    %c0_11 = arith.constant 0 : index
    %6 = vector.load %arg4[%c0_9, %c0_10, %c0_11] : memref<2x32x32xf32, #tpu.memory_space<vmem>>, vector<1x32x32xf32>
    %7 = vector.shape_cast %6 : vector<1x32x32xf32> to vector<32x32xf32>
    %c0_12 = arith.constant 0 : index
    %c0_13 = arith.constant 0 : index
    %c0_14 = arith.constant 0 : index
    %8 = vector.load %arg5[%c0_12, %c0_13, %c0_14] : memref<2x1x32xf32, #tpu.memory_space<vmem>>, vector<1x1x32xf32>
    %9 = vector.shape_cast %8 : vector<1x1x32xf32> to vector<1x32xf32>
    %c0_15 = arith.constant 0 : index
    %c0_16 = arith.constant 0 : index
    %c0_17 = arith.constant 0 : index
    %10 = vector.load %arg6[%c0_15, %c0_16, %c0_17] : memref<2x32x32xf32, #tpu.memory_space<vmem>>, vector<1x32x32xf32>
    %11 = vector.shape_cast %10 : vector<1x32x32xf32> to vector<32x32xf32>
    %c0_18 = arith.constant 0 : index
    %c0_19 = arith.constant 0 : index
    %c0_20 = arith.constant 0 : index
    %12 = vector.load %arg7[%c0_18, %c0_19, %c0_20] : memref<2x1x32xf32, #tpu.memory_space<vmem>>, vector<1x1x32xf32>
    %13 = vector.shape_cast %12 : vector<1x1x32xf32> to vector<1x32xf32>
    %c0_21 = arith.constant 0 : index
    %c0_22 = arith.constant 0 : index
    %c0_23 = arith.constant 0 : index
    %14 = vector.load %arg8[%c0_21, %c0_22, %c0_23] : memref<2x32x32xf32, #tpu.memory_space<vmem>>, vector<1x32x32xf32>
    %15 = vector.shape_cast %14 : vector<1x32x32xf32> to vector<32x32xf32>
    %c0_24 = arith.constant 0 : index
    %c0_25 = arith.constant 0 : index
    %c0_26 = arith.constant 0 : index
    %16 = vector.load %arg9[%c0_24, %c0_25, %c0_26] : memref<2x1x32xf32, #tpu.memory_space<vmem>>, vector<1x1x32xf32>
    %17 = vector.shape_cast %16 : vector<1x1x32xf32> to vector<1x32xf32>
    %c0_27 = arith.constant 0 : index
    %c0_28 = arith.constant 0 : index
    %c0_29 = arith.constant 0 : index
    %18 = vector.load %arg10[%c0_27, %c0_28, %c0_29] : memref<2x1x32xf32, #tpu.memory_space<vmem>>, vector<1x1x32xf32>
    %19 = vector.shape_cast %18 : vector<1x1x32xf32> to vector<1x32xf32>
    %c0_30 = arith.constant 0 : index
    %c0_31 = arith.constant 0 : index
    %c0_32 = arith.constant 0 : index
    %20 = vector.load %arg11[%c0_30, %c0_31, %c0_32] : memref<2x1x32xf32, #tpu.memory_space<vmem>>, vector<1x1x32xf32>
    %21 = vector.shape_cast %20 : vector<1x1x32xf32> to vector<1x32xf32>
    %c0_33 = arith.constant 0 : index
    %c0_34 = arith.constant 0 : index
    %c0_35 = arith.constant 0 : index
    %22 = vector.load %arg12[%c0_33, %c0_34, %c0_35] : memref<2x32x128xf32, #tpu.memory_space<vmem>>, vector<1x32x128xf32>
    %23 = vector.shape_cast %22 : vector<1x32x128xf32> to vector<32x128xf32>
    %c0_36 = arith.constant 0 : index
    %c0_37 = arith.constant 0 : index
    %c0_38 = arith.constant 0 : index
    %24 = vector.load %arg13[%c0_36, %c0_37, %c0_38] : memref<2x1x128xf32, #tpu.memory_space<vmem>>, vector<1x1x128xf32>
    %25 = vector.shape_cast %24 : vector<1x1x128xf32> to vector<1x128xf32>
    %c0_39 = arith.constant 0 : index
    %c0_40 = arith.constant 0 : index
    %c0_41 = arith.constant 0 : index
    %26 = vector.load %arg14[%c0_39, %c0_40, %c0_41] : memref<2x128x32xf32, #tpu.memory_space<vmem>>, vector<1x128x32xf32>
    %27 = vector.shape_cast %26 : vector<1x128x32xf32> to vector<128x32xf32>
    %c0_42 = arith.constant 0 : index
    %c0_43 = arith.constant 0 : index
    %c0_44 = arith.constant 0 : index
    %28 = vector.load %arg15[%c0_42, %c0_43, %c0_44] : memref<2x1x32xf32, #tpu.memory_space<vmem>>, vector<1x1x32xf32>
    %29 = vector.shape_cast %28 : vector<1x1x32xf32> to vector<1x32xf32>
    %c0_45 = arith.constant 0 : index
    %c0_46 = arith.constant 0 : index
    %c0_47 = arith.constant 0 : index
    %30 = vector.load %arg16[%c0_45, %c0_46, %c0_47] : memref<2x1x32xf32, #tpu.memory_space<vmem>>, vector<1x1x32xf32>
    %31 = vector.shape_cast %30 : vector<1x1x32xf32> to vector<1x32xf32>
    %c0_48 = arith.constant 0 : index
    %c0_49 = arith.constant 0 : index
    %c0_50 = arith.constant 0 : index
    %32 = vector.load %arg17[%c0_48, %c0_49, %c0_50] : memref<2x1x32xf32, #tpu.memory_space<vmem>>, vector<1x1x32xf32>
    %33 = vector.shape_cast %32 : vector<1x1x32xf32> to vector<1x32xf32>
    %cst = arith.constant dense<0.000000e+00> : vector<16x32xf32>
    %34 = tpu.matmul %0, %3, %cst {dimension_numbers = #tpu.dot_dimension_numbers<[1], [0], [0], [1], [0, 0, 1, 1], [], []>} : vector<16x32xf32>, vector<32x32xf32>, vector<16x32xf32> -> vector<16x32xf32>
    %35 = vector.broadcast %5 : vector<1x32xf32> to vector<16x32xf32>
    %36 = arith.addf %34, %35 : vector<16x32xf32>
    %cst_51 = arith.constant dense<0.000000e+00> : vector<16x32xf32>
    %37 = tpu.matmul %0, %7, %cst_51 {dimension_numbers = #tpu.dot_dimension_numbers<[1], [0], [0], [1], [0, 0, 1, 1], [], []>} : vector<16x32xf32>, vector<32x32xf32>, vector<16x32xf32> -> vector<16x32xf32>
    %38 = vector.broadcast %9 : vector<1x32xf32> to vector<16x32xf32>
    %39 = arith.addf %37, %38 : vector<16x32xf32>
    %cst_52 = arith.constant dense<0.000000e+00> : vector<16x32xf32>
    %40 = tpu.matmul %0, %11, %cst_52 {dimension_numbers = #tpu.dot_dimension_numbers<[1], [0], [0], [1], [0, 0, 1, 1], [], []>} : vector<16x32xf32>, vector<32x32xf32>, vector<16x32xf32> -> vector<16x32xf32>
    %41 = vector.broadcast %13 : vector<1x32xf32> to vector<16x32xf32>
    %42 = arith.addf %40, %41 : vector<16x32xf32>
    %43 = vector.extract_strided_slice %36 {offsets = [0, 0], sizes = [16, 8], strides = [1, 1]} : vector<16x32xf32> to vector<16x8xf32>
    %44 = vector.extract_strided_slice %39 {offsets = [0, 0], sizes = [16, 8], strides = [1, 1]} : vector<16x32xf32> to vector<16x8xf32>
    %45 = vector.extract_strided_slice %42 {offsets = [0, 0], sizes = [16, 8], strides = [1, 1]} : vector<16x32xf32> to vector<16x8xf32>
    %cst_53 = arith.constant dense<0.000000e+00> : vector<16x16xf32>
    %46 = tpu.matmul %43, %44, %cst_53 {dimension_numbers = #tpu.dot_dimension_numbers<[1], [1], [0], [0], [0, 0, 1, 0], [], []>} : vector<16x8xf32>, vector<16x8xf32>, vector<16x16xf32> -> vector<16x16xf32>
    %cst_54 = arith.constant 2.500000e-01 : f32
    %47 = vector.broadcast %cst_54 : f32 to vector<16x16xf32>
    %48 = arith.mulf %46, %47 : vector<16x16xf32>
    %49 = arith.addf %48, %1 : vector<16x16xf32>
    %cst_55 = arith.constant dense<0xFF800000> : vector<16xf32>
    %50 = vector.multi_reduction <maximumf>, %49, %cst_55 [1] : vector<16x16xf32> to vector<16xf32>
    %51 = vector.shape_cast %50 : vector<16xf32> to vector<16x1xf32>
    %52 = vector.broadcast %51 : vector<16x1xf32> to vector<16x16xf32>
    %53 = arith.subf %49, %52 : vector<16x16xf32>
    %54 = math.exp %53 : vector<16x16xf32>
    %cst_56 = arith.constant dense<0.000000e+00> : vector<16xf32>
    %55 = vector.multi_reduction <add>, %54, %cst_56 [1] : vector<16x16xf32> to vector<16xf32>
    %56 = vector.shape_cast %55 : vector<16xf32> to vector<16x1xf32>
    %57 = tpu.reciprocal %56 {approx = true} : vector<16x1xf32> -> vector<16x1xf32>
    %58 = vector.broadcast %57 : vector<16x1xf32> to vector<16x16xf32>
    %59 = arith.mulf %54, %58 : vector<16x16xf32>
    %cst_57 = arith.constant dense<0.000000e+00> : vector<16x8xf32>
    %60 = tpu.matmul %59, %45, %cst_57 {dimension_numbers = #tpu.dot_dimension_numbers<[1], [0], [0], [1], [0, 0, 1, 1], [], []>} : vector<16x16xf32>, vector<16x8xf32>, vector<16x8xf32> -> vector<16x8xf32>
    %61 = vector.extract_strided_slice %15 {offsets = [0, 0], sizes = [8, 32], strides = [1, 1]} : vector<32x32xf32> to vector<8x32xf32>
    %cst_58 = arith.constant dense<0.000000e+00> : vector<16x32xf32>
    %62 = tpu.matmul %60, %61, %cst_58 {dimension_numbers = #tpu.dot_dimension_numbers<[1], [0], [0], [1], [0, 0, 1, 1], [], []>} : vector<16x8xf32>, vector<8x32xf32>, vector<16x32xf32> -> vector<16x32xf32>
    %63 = vector.extract_strided_slice %36 {offsets = [0, 8], sizes = [16, 8], strides = [1, 1]} : vector<16x32xf32> to vector<16x8xf32>
    %64 = vector.extract_strided_slice %39 {offsets = [0, 8], sizes = [16, 8], strides = [1, 1]} : vector<16x32xf32> to vector<16x8xf32>
    %65 = vector.extract_strided_slice %42 {offsets = [0, 8], sizes = [16, 8], strides = [1, 1]} : vector<16x32xf32> to vector<16x8xf32>
    %cst_59 = arith.constant dense<0.000000e+00> : vector<16x16xf32>
    %66 = tpu.matmul %63, %64, %cst_59 {dimension_numbers = #tpu.dot_dimension_numbers<[1], [1], [0], [0], [0, 0, 1, 0], [], []>} : vector<16x8xf32>, vector<16x8xf32>, vector<16x16xf32> -> vector<16x16xf32>
    %cst_60 = arith.constant 2.500000e-01 : f32
    %67 = vector.broadcast %cst_60 : f32 to vector<16x16xf32>
    %68 = arith.mulf %66, %67 : vector<16x16xf32>
    %69 = arith.addf %68, %1 : vector<16x16xf32>
    %cst_61 = arith.constant dense<0xFF800000> : vector<16xf32>
    %70 = vector.multi_reduction <maximumf>, %69, %cst_61 [1] : vector<16x16xf32> to vector<16xf32>
    %71 = vector.shape_cast %70 : vector<16xf32> to vector<16x1xf32>
    %72 = vector.broadcast %71 : vector<16x1xf32> to vector<16x16xf32>
    %73 = arith.subf %69, %72 : vector<16x16xf32>
    %74 = math.exp %73 : vector<16x16xf32>
    %cst_62 = arith.constant dense<0.000000e+00> : vector<16xf32>
    %75 = vector.multi_reduction <add>, %74, %cst_62 [1] : vector<16x16xf32> to vector<16xf32>
    %76 = vector.shape_cast %75 : vector<16xf32> to vector<16x1xf32>
    %77 = tpu.reciprocal %76 {approx = true} : vector<16x1xf32> -> vector<16x1xf32>
    %78 = vector.broadcast %77 : vector<16x1xf32> to vector<16x16xf32>
    %79 = arith.mulf %74, %78 : vector<16x16xf32>
    %cst_63 = arith.constant dense<0.000000e+00> : vector<16x8xf32>
    %80 = tpu.matmul %79, %65, %cst_63 {dimension_numbers = #tpu.dot_dimension_numbers<[1], [0], [0], [1], [0, 0, 1, 1], [], []>} : vector<16x16xf32>, vector<16x8xf32>, vector<16x8xf32> -> vector<16x8xf32>
    %81 = vector.extract_strided_slice %15 {offsets = [8, 0], sizes = [8, 32], strides = [1, 1]} : vector<32x32xf32> to vector<8x32xf32>
    %cst_64 = arith.constant dense<0.000000e+00> : vector<16x32xf32>
    %82 = tpu.matmul %80, %81, %cst_64 {dimension_numbers = #tpu.dot_dimension_numbers<[1], [0], [0], [1], [0, 0, 1, 1], [], []>} : vector<16x8xf32>, vector<8x32xf32>, vector<16x32xf32> -> vector<16x32xf32>
    %83 = arith.addf %62, %82 : vector<16x32xf32>
    %84 = vector.extract_strided_slice %36 {offsets = [0, 16], sizes = [16, 8], strides = [1, 1]} : vector<16x32xf32> to vector<16x8xf32>
    %85 = vector.extract_strided_slice %39 {offsets = [0, 16], sizes = [16, 8], strides = [1, 1]} : vector<16x32xf32> to vector<16x8xf32>
    %86 = vector.extract_strided_slice %42 {offsets = [0, 16], sizes = [16, 8], strides = [1, 1]} : vector<16x32xf32> to vector<16x8xf32>
    %cst_65 = arith.constant dense<0.000000e+00> : vector<16x16xf32>
    %87 = tpu.matmul %84, %85, %cst_65 {dimension_numbers = #tpu.dot_dimension_numbers<[1], [1], [0], [0], [0, 0, 1, 0], [], []>} : vector<16x8xf32>, vector<16x8xf32>, vector<16x16xf32> -> vector<16x16xf32>
    %cst_66 = arith.constant 2.500000e-01 : f32
    %88 = vector.broadcast %cst_66 : f32 to vector<16x16xf32>
    %89 = arith.mulf %87, %88 : vector<16x16xf32>
    %90 = arith.addf %89, %1 : vector<16x16xf32>
    %cst_67 = arith.constant dense<0xFF800000> : vector<16xf32>
    %91 = vector.multi_reduction <maximumf>, %90, %cst_67 [1] : vector<16x16xf32> to vector<16xf32>
    %92 = vector.shape_cast %91 : vector<16xf32> to vector<16x1xf32>
    %93 = vector.broadcast %92 : vector<16x1xf32> to vector<16x16xf32>
    %94 = arith.subf %90, %93 : vector<16x16xf32>
    %95 = math.exp %94 : vector<16x16xf32>
    %cst_68 = arith.constant dense<0.000000e+00> : vector<16xf32>
    %96 = vector.multi_reduction <add>, %95, %cst_68 [1] : vector<16x16xf32> to vector<16xf32>
    %97 = vector.shape_cast %96 : vector<16xf32> to vector<16x1xf32>
    %98 = tpu.reciprocal %97 {approx = true} : vector<16x1xf32> -> vector<16x1xf32>
    %99 = vector.broadcast %98 : vector<16x1xf32> to vector<16x16xf32>
    %100 = arith.mulf %95, %99 : vector<16x16xf32>
    %cst_69 = arith.constant dense<0.000000e+00> : vector<16x8xf32>
    %101 = tpu.matmul %100, %86, %cst_69 {dimension_numbers = #tpu.dot_dimension_numbers<[1], [0], [0], [1], [0, 0, 1, 1], [], []>} : vector<16x16xf32>, vector<16x8xf32>, vector<16x8xf32> -> vector<16x8xf32>
    %102 = vector.extract_strided_slice %15 {offsets = [16, 0], sizes = [8, 32], strides = [1, 1]} : vector<32x32xf32> to vector<8x32xf32>
    %cst_70 = arith.constant dense<0.000000e+00> : vector<16x32xf32>
    %103 = tpu.matmul %101, %102, %cst_70 {dimension_numbers = #tpu.dot_dimension_numbers<[1], [0], [0], [1], [0, 0, 1, 1], [], []>} : vector<16x8xf32>, vector<8x32xf32>, vector<16x32xf32> -> vector<16x32xf32>
    %104 = arith.addf %83, %103 : vector<16x32xf32>
    %105 = vector.extract_strided_slice %36 {offsets = [0, 24], sizes = [16, 8], strides = [1, 1]} : vector<16x32xf32> to vector<16x8xf32>
    %106 = vector.extract_strided_slice %39 {offsets = [0, 24], sizes = [16, 8], strides = [1, 1]} : vector<16x32xf32> to vector<16x8xf32>
    %107 = vector.extract_strided_slice %42 {offsets = [0, 24], sizes = [16, 8], strides = [1, 1]} : vector<16x32xf32> to vector<16x8xf32>
    %cst_71 = arith.constant dense<0.000000e+00> : vector<16x16xf32>
    %108 = tpu.matmul %105, %106, %cst_71 {dimension_numbers = #tpu.dot_dimension_numbers<[1], [1], [0], [0], [0, 0, 1, 0], [], []>} : vector<16x8xf32>, vector<16x8xf32>, vector<16x16xf32> -> vector<16x16xf32>
    %cst_72 = arith.constant 2.500000e-01 : f32
    %109 = vector.broadcast %cst_72 : f32 to vector<16x16xf32>
    %110 = arith.mulf %108, %109 : vector<16x16xf32>
    %111 = arith.addf %110, %1 : vector<16x16xf32>
    %cst_73 = arith.constant dense<0xFF800000> : vector<16xf32>
    %112 = vector.multi_reduction <maximumf>, %111, %cst_73 [1] : vector<16x16xf32> to vector<16xf32>
    %113 = vector.shape_cast %112 : vector<16xf32> to vector<16x1xf32>
    %114 = vector.broadcast %113 : vector<16x1xf32> to vector<16x16xf32>
    %115 = arith.subf %111, %114 : vector<16x16xf32>
    %116 = math.exp %115 : vector<16x16xf32>
    %cst_74 = arith.constant dense<0.000000e+00> : vector<16xf32>
    %117 = vector.multi_reduction <add>, %116, %cst_74 [1] : vector<16x16xf32> to vector<16xf32>
    %118 = vector.shape_cast %117 : vector<16xf32> to vector<16x1xf32>
    %119 = tpu.reciprocal %118 {approx = true} : vector<16x1xf32> -> vector<16x1xf32>
    %120 = vector.broadcast %119 : vector<16x1xf32> to vector<16x16xf32>
    %121 = arith.mulf %116, %120 : vector<16x16xf32>
    %cst_75 = arith.constant dense<0.000000e+00> : vector<16x8xf32>
    %122 = tpu.matmul %121, %107, %cst_75 {dimension_numbers = #tpu.dot_dimension_numbers<[1], [0], [0], [1], [0, 0, 1, 1], [], []>} : vector<16x16xf32>, vector<16x8xf32>, vector<16x8xf32> -> vector<16x8xf32>
    %123 = vector.extract_strided_slice %15 {offsets = [24, 0], sizes = [8, 32], strides = [1, 1]} : vector<32x32xf32> to vector<8x32xf32>
    %cst_76 = arith.constant dense<0.000000e+00> : vector<16x32xf32>
    %124 = tpu.matmul %122, %123, %cst_76 {dimension_numbers = #tpu.dot_dimension_numbers<[1], [0], [0], [1], [0, 0, 1, 1], [], []>} : vector<16x8xf32>, vector<8x32xf32>, vector<16x32xf32> -> vector<16x32xf32>
    %125 = arith.addf %104, %124 : vector<16x32xf32>
    %126 = vector.broadcast %17 : vector<1x32xf32> to vector<16x32xf32>
    %127 = arith.addf %125, %126 : vector<16x32xf32>
    %128 = arith.addf %127, %0 : vector<16x32xf32>
    %cst_77 = arith.constant dense<0.000000e+00> : vector<16xf32>
    %129 = vector.multi_reduction <add>, %128, %cst_77 [1] : vector<16x32xf32> to vector<16xf32>
    %130 = vector.shape_cast %129 : vector<16xf32> to vector<16x1xf32>
    %cst_78 = arith.constant 3.200000e+01 : f32
    %131 = vector.broadcast %cst_78 : f32 to vector<16x1xf32>
    %132 = arith.divf %130, %131 : vector<16x1xf32>
    %133 = vector.broadcast %132 : vector<16x1xf32> to vector<16x32xf32>
    %134 = arith.subf %128, %133 : vector<16x32xf32>
    %135 = arith.mulf %134, %134 : vector<16x32xf32>
    %cst_79 = arith.constant dense<0.000000e+00> : vector<16xf32>
    %136 = vector.multi_reduction <add>, %135, %cst_79 [1] : vector<16x32xf32> to vector<16xf32>
    %137 = vector.shape_cast %136 : vector<16xf32> to vector<16x1xf32>
    %cst_80 = arith.constant 3.200000e+01 : f32
    %138 = vector.broadcast %cst_80 : f32 to vector<16x1xf32>
    %139 = arith.divf %137, %138 : vector<16x1xf32>
    %cst_81 = arith.constant 9.99999974E-6 : f32
    %140 = vector.broadcast %cst_81 : f32 to vector<16x1xf32>
    %141 = arith.addf %139, %140 : vector<16x1xf32>
    %142 = math.rsqrt %141 : vector<16x1xf32>
    %143 = vector.broadcast %142 : vector<16x1xf32> to vector<16x32xf32>
    %144 = arith.mulf %134, %143 : vector<16x32xf32>
    %145 = vector.broadcast %19 : vector<1x32xf32> to vector<16x32xf32>
    %146 = arith.mulf %144, %145 : vector<16x32xf32>
    %147 = vector.broadcast %21 : vector<1x32xf32> to vector<16x32xf32>
    %148 = arith.addf %146, %147 : vector<16x32xf32>
    %cst_82 = arith.constant dense<0.000000e+00> : vector<16x128xf32>
    %149 = tpu.matmul %148, %23, %cst_82 {dimension_numbers = #tpu.dot_dimension_numbers<[1], [0], [0], [1], [0, 0, 1, 1], [], []>} : vector<16x32xf32>, vector<32x128xf32>, vector<16x128xf32> -> vector<16x128xf32>
    %150 = vector.broadcast %25 : vector<1x128xf32> to vector<16x128xf32>
    %151 = arith.addf %149, %150 : vector<16x128xf32>
    %cst_83 = arith.constant 5.000000e-01 : f32
    %152 = vector.broadcast %cst_83 : f32 to vector<16x128xf32>
    %153 = arith.mulf %152, %151 : vector<16x128xf32>
    %cst_84 = arith.constant 0.707106769 : f32
    %154 = vector.broadcast %cst_84 : f32 to vector<16x128xf32>
    %155 = arith.mulf %151, %154 : vector<16x128xf32>
    %156 = math.erf %155 : vector<16x128xf32>
    %cst_85 = arith.constant 1.000000e+00 : f32
    %157 = vector.broadcast %cst_85 : f32 to vector<16x128xf32>
    %158 = arith.addf %157, %156 : vector<16x128xf32>
    %159 = arith.mulf %153, %158 : vector<16x128xf32>
    %cst_86 = arith.constant dense<0.000000e+00> : vector<16x32xf32>
    %160 = tpu.matmul %159, %27, %cst_86 {dimension_numbers = #tpu.dot_dimension_numbers<[1], [0], [0], [1], [0, 0, 1, 1], [], []>} : vector<16x128xf32>, vector<128x32xf32>, vector<16x32xf32> -> vector<16x32xf32>
    %161 = vector.broadcast %29 : vector<1x32xf32> to vector<16x32xf32>
    %162 = arith.addf %160, %161 : vector<16x32xf32>
    %163 = arith.addf %162, %148 : vector<16x32xf32>
    %cst_87 = arith.constant dense<0.000000e+00> : vector<16xf32>
    %164 = vector.multi_reduction <add>, %163, %cst_87 [1] : vector<16x32xf32> to vector<16xf32>
    %165 = vector.shape_cast %164 : vector<16xf32> to vector<16x1xf32>
    %cst_88 = arith.constant 3.200000e+01 : f32
    %166 = vector.broadcast %cst_88 : f32 to vector<16x1xf32>
    %167 = arith.divf %165, %166 : vector<16x1xf32>
    %168 = vector.broadcast %167 : vector<16x1xf32> to vector<16x32xf32>
    %169 = arith.subf %163, %168 : vector<16x32xf32>
    %170 = arith.mulf %169, %169 : vector<16x32xf32>
    %cst_89 = arith.constant dense<0.000000e+00> : vector<16xf32>
    %171 = vector.multi_reduction <add>, %170, %cst_89 [1] : vector<16x32xf32> to vector<16xf32>
    %172 = vector.shape_cast %171 : vector<16xf32> to vector<16x1xf32>
    %cst_90 = arith.constant 3.200000e+01 : f32
    %173 = vector.broadcast %cst_90 : f32 to vector<16x1xf32>
    %174 = arith.divf %172, %173 : vector<16x1xf32>
    %cst_91 = arith.constant 9.99999974E-6 : f32
    %175 = vector.broadcast %cst_91 : f32 to vector<16x1xf32>
    %176 = arith.addf %174, %175 : vector<16x1xf32>
    %177 = math.rsqrt %176 : vector<16x1xf32>
    %178 = vector.broadcast %177 : vector<16x1xf32> to vector<16x32xf32>
    %179 = arith.mulf %169, %178 : vector<16x32xf32>
    %180 = vector.broadcast %31 : vector<1x32xf32> to vector<16x32xf32>
    %181 = arith.mulf %179, %180 : vector<16x32xf32>
    %182 = vector.broadcast %33 : vector<1x32xf32> to vector<16x32xf32>
    %183 = arith.addf %181, %182 : vector<16x32xf32>
    %c1 = arith.constant 1 : index
    %c0_92 = arith.constant 0 : index
    %c0_93 = arith.constant 0 : index
    %184 = vector.load %arg2[%c1, %c0_92, %c0_93] : memref<2x32x32xf32, #tpu.memory_space<vmem>>, vector<1x32x32xf32>
    %185 = vector.shape_cast %184 : vector<1x32x32xf32> to vector<32x32xf32>
    %c1_94 = arith.constant 1 : index
    %c0_95 = arith.constant 0 : index
    %c0_96 = arith.constant 0 : index
    %186 = vector.load %arg3[%c1_94, %c0_95, %c0_96] : memref<2x1x32xf32, #tpu.memory_space<vmem>>, vector<1x1x32xf32>
    %187 = vector.shape_cast %186 : vector<1x1x32xf32> to vector<1x32xf32>
    %c1_97 = arith.constant 1 : index
    %c0_98 = arith.constant 0 : index
    %c0_99 = arith.constant 0 : index
    %188 = vector.load %arg4[%c1_97, %c0_98, %c0_99] : memref<2x32x32xf32, #tpu.memory_space<vmem>>, vector<1x32x32xf32>
    %189 = vector.shape_cast %188 : vector<1x32x32xf32> to vector<32x32xf32>
    %c1_100 = arith.constant 1 : index
    %c0_101 = arith.constant 0 : index
    %c0_102 = arith.constant 0 : index
    %190 = vector.load %arg5[%c1_100, %c0_101, %c0_102] : memref<2x1x32xf32, #tpu.memory_space<vmem>>, vector<1x1x32xf32>
    %191 = vector.shape_cast %190 : vector<1x1x32xf32> to vector<1x32xf32>
    %c1_103 = arith.constant 1 : index
    %c0_104 = arith.constant 0 : index
    %c0_105 = arith.constant 0 : index
    %192 = vector.load %arg6[%c1_103, %c0_104, %c0_105] : memref<2x32x32xf32, #tpu.memory_space<vmem>>, vector<1x32x32xf32>
    %193 = vector.shape_cast %192 : vector<1x32x32xf32> to vector<32x32xf32>
    %c1_106 = arith.constant 1 : index
    %c0_107 = arith.constant 0 : index
    %c0_108 = arith.constant 0 : index
    %194 = vector.load %arg7[%c1_106, %c0_107, %c0_108] : memref<2x1x32xf32, #tpu.memory_space<vmem>>, vector<1x1x32xf32>
    %195 = vector.shape_cast %194 : vector<1x1x32xf32> to vector<1x32xf32>
    %c1_109 = arith.constant 1 : index
    %c0_110 = arith.constant 0 : index
    %c0_111 = arith.constant 0 : index
    %196 = vector.load %arg8[%c1_109, %c0_110, %c0_111] : memref<2x32x32xf32, #tpu.memory_space<vmem>>, vector<1x32x32xf32>
    %197 = vector.shape_cast %196 : vector<1x32x32xf32> to vector<32x32xf32>
    %c1_112 = arith.constant 1 : index
    %c0_113 = arith.constant 0 : index
    %c0_114 = arith.constant 0 : index
    %198 = vector.load %arg9[%c1_112, %c0_113, %c0_114] : memref<2x1x32xf32, #tpu.memory_space<vmem>>, vector<1x1x32xf32>
    %199 = vector.shape_cast %198 : vector<1x1x32xf32> to vector<1x32xf32>
    %c1_115 = arith.constant 1 : index
    %c0_116 = arith.constant 0 : index
    %c0_117 = arith.constant 0 : index
    %200 = vector.load %arg10[%c1_115, %c0_116, %c0_117] : memref<2x1x32xf32, #tpu.memory_space<vmem>>, vector<1x1x32xf32>
    %201 = vector.shape_cast %200 : vector<1x1x32xf32> to vector<1x32xf32>
    %c1_118 = arith.constant 1 : index
    %c0_119 = arith.constant 0 : index
    %c0_120 = arith.constant 0 : index
    %202 = vector.load %arg11[%c1_118, %c0_119, %c0_120] : memref<2x1x32xf32, #tpu.memory_space<vmem>>, vector<1x1x32xf32>
    %203 = vector.shape_cast %202 : vector<1x1x32xf32> to vector<1x32xf32>
    %c1_121 = arith.constant 1 : index
    %c0_122 = arith.constant 0 : index
    %c0_123 = arith.constant 0 : index
    %204 = vector.load %arg12[%c1_121, %c0_122, %c0_123] : memref<2x32x128xf32, #tpu.memory_space<vmem>>, vector<1x32x128xf32>
    %205 = vector.shape_cast %204 : vector<1x32x128xf32> to vector<32x128xf32>
    %c1_124 = arith.constant 1 : index
    %c0_125 = arith.constant 0 : index
    %c0_126 = arith.constant 0 : index
    %206 = vector.load %arg13[%c1_124, %c0_125, %c0_126] : memref<2x1x128xf32, #tpu.memory_space<vmem>>, vector<1x1x128xf32>
    %207 = vector.shape_cast %206 : vector<1x1x128xf32> to vector<1x128xf32>
    %c1_127 = arith.constant 1 : index
    %c0_128 = arith.constant 0 : index
    %c0_129 = arith.constant 0 : index
    %208 = vector.load %arg14[%c1_127, %c0_128, %c0_129] : memref<2x128x32xf32, #tpu.memory_space<vmem>>, vector<1x128x32xf32>
    %209 = vector.shape_cast %208 : vector<1x128x32xf32> to vector<128x32xf32>
    %c1_130 = arith.constant 1 : index
    %c0_131 = arith.constant 0 : index
    %c0_132 = arith.constant 0 : index
    %210 = vector.load %arg15[%c1_130, %c0_131, %c0_132] : memref<2x1x32xf32, #tpu.memory_space<vmem>>, vector<1x1x32xf32>
    %211 = vector.shape_cast %210 : vector<1x1x32xf32> to vector<1x32xf32>
    %c1_133 = arith.constant 1 : index
    %c0_134 = arith.constant 0 : index
    %c0_135 = arith.constant 0 : index
    %212 = vector.load %arg16[%c1_133, %c0_134, %c0_135] : memref<2x1x32xf32, #tpu.memory_space<vmem>>, vector<1x1x32xf32>
    %213 = vector.shape_cast %212 : vector<1x1x32xf32> to vector<1x32xf32>
    %c1_136 = arith.constant 1 : index
    %c0_137 = arith.constant 0 : index
    %c0_138 = arith.constant 0 : index
    %214 = vector.load %arg17[%c1_136, %c0_137, %c0_138] : memref<2x1x32xf32, #tpu.memory_space<vmem>>, vector<1x1x32xf32>
    %215 = vector.shape_cast %214 : vector<1x1x32xf32> to vector<1x32xf32>
    %cst_139 = arith.constant dense<0.000000e+00> : vector<16x32xf32>
    %216 = tpu.matmul %183, %185, %cst_139 {dimension_numbers = #tpu.dot_dimension_numbers<[1], [0], [0], [1], [0, 0, 1, 1], [], []>} : vector<16x32xf32>, vector<32x32xf32>, vector<16x32xf32> -> vector<16x32xf32>
    %217 = vector.broadcast %187 : vector<1x32xf32> to vector<16x32xf32>
    %218 = arith.addf %216, %217 : vector<16x32xf32>
    %cst_140 = arith.constant dense<0.000000e+00> : vector<16x32xf32>
    %219 = tpu.matmul %183, %189, %cst_140 {dimension_numbers = #tpu.dot_dimension_numbers<[1], [0], [0], [1], [0, 0, 1, 1], [], []>} : vector<16x32xf32>, vector<32x32xf32>, vector<16x32xf32> -> vector<16x32xf32>
    %220 = vector.broadcast %191 : vector<1x32xf32> to vector<16x32xf32>
    %221 = arith.addf %219, %220 : vector<16x32xf32>
    %cst_141 = arith.constant dense<0.000000e+00> : vector<16x32xf32>
    %222 = tpu.matmul %183, %193, %cst_141 {dimension_numbers = #tpu.dot_dimension_numbers<[1], [0], [0], [1], [0, 0, 1, 1], [], []>} : vector<16x32xf32>, vector<32x32xf32>, vector<16x32xf32> -> vector<16x32xf32>
    %223 = vector.broadcast %195 : vector<1x32xf32> to vector<16x32xf32>
    %224 = arith.addf %222, %223 : vector<16x32xf32>
    %225 = vector.extract_strided_slice %218 {offsets = [0, 0], sizes = [16, 8], strides = [1, 1]} : vector<16x32xf32> to vector<16x8xf32>
    %226 = vector.extract_strided_slice %221 {offsets = [0, 0], sizes = [16, 8], strides = [1, 1]} : vector<16x32xf32> to vector<16x8xf32>
    %227 = vector.extract_strided_slice %224 {offsets = [0, 0], sizes = [16, 8], strides = [1, 1]} : vector<16x32xf32> to vector<16x8xf32>
    %cst_142 = arith.constant dense<0.000000e+00> : vector<16x16xf32>
    %228 = tpu.matmul %225, %226, %cst_142 {dimension_numbers = #tpu.dot_dimension_numbers<[1], [1], [0], [0], [0, 0, 1, 0], [], []>} : vector<16x8xf32>, vector<16x8xf32>, vector<16x16xf32> -> vector<16x16xf32>
    %cst_143 = arith.constant 2.500000e-01 : f32
    %229 = vector.broadcast %cst_143 : f32 to vector<16x16xf32>
    %230 = arith.mulf %228, %229 : vector<16x16xf32>
    %231 = arith.addf %230, %1 : vector<16x16xf32>
    %cst_144 = arith.constant dense<0xFF800000> : vector<16xf32>
    %232 = vector.multi_reduction <maximumf>, %231, %cst_144 [1] : vector<16x16xf32> to vector<16xf32>
    %233 = vector.shape_cast %232 : vector<16xf32> to vector<16x1xf32>
    %234 = vector.broadcast %233 : vector<16x1xf32> to vector<16x16xf32>
    %235 = arith.subf %231, %234 : vector<16x16xf32>
    %236 = math.exp %235 : vector<16x16xf32>
    %cst_145 = arith.constant dense<0.000000e+00> : vector<16xf32>
    %237 = vector.multi_reduction <add>, %236, %cst_145 [1] : vector<16x16xf32> to vector<16xf32>
    %238 = vector.shape_cast %237 : vector<16xf32> to vector<16x1xf32>
    %239 = tpu.reciprocal %238 {approx = true} : vector<16x1xf32> -> vector<16x1xf32>
    %240 = vector.broadcast %239 : vector<16x1xf32> to vector<16x16xf32>
    %241 = arith.mulf %236, %240 : vector<16x16xf32>
    %cst_146 = arith.constant dense<0.000000e+00> : vector<16x8xf32>
    %242 = tpu.matmul %241, %227, %cst_146 {dimension_numbers = #tpu.dot_dimension_numbers<[1], [0], [0], [1], [0, 0, 1, 1], [], []>} : vector<16x16xf32>, vector<16x8xf32>, vector<16x8xf32> -> vector<16x8xf32>
    %243 = vector.extract_strided_slice %197 {offsets = [0, 0], sizes = [8, 32], strides = [1, 1]} : vector<32x32xf32> to vector<8x32xf32>
    %cst_147 = arith.constant dense<0.000000e+00> : vector<16x32xf32>
    %244 = tpu.matmul %242, %243, %cst_147 {dimension_numbers = #tpu.dot_dimension_numbers<[1], [0], [0], [1], [0, 0, 1, 1], [], []>} : vector<16x8xf32>, vector<8x32xf32>, vector<16x32xf32> -> vector<16x32xf32>
    %245 = vector.extract_strided_slice %218 {offsets = [0, 8], sizes = [16, 8], strides = [1, 1]} : vector<16x32xf32> to vector<16x8xf32>
    %246 = vector.extract_strided_slice %221 {offsets = [0, 8], sizes = [16, 8], strides = [1, 1]} : vector<16x32xf32> to vector<16x8xf32>
    %247 = vector.extract_strided_slice %224 {offsets = [0, 8], sizes = [16, 8], strides = [1, 1]} : vector<16x32xf32> to vector<16x8xf32>
    %cst_148 = arith.constant dense<0.000000e+00> : vector<16x16xf32>
    %248 = tpu.matmul %245, %246, %cst_148 {dimension_numbers = #tpu.dot_dimension_numbers<[1], [1], [0], [0], [0, 0, 1, 0], [], []>} : vector<16x8xf32>, vector<16x8xf32>, vector<16x16xf32> -> vector<16x16xf32>
    %cst_149 = arith.constant 2.500000e-01 : f32
    %249 = vector.broadcast %cst_149 : f32 to vector<16x16xf32>
    %250 = arith.mulf %248, %249 : vector<16x16xf32>
    %251 = arith.addf %250, %1 : vector<16x16xf32>
    %cst_150 = arith.constant dense<0xFF800000> : vector<16xf32>
    %252 = vector.multi_reduction <maximumf>, %251, %cst_150 [1] : vector<16x16xf32> to vector<16xf32>
    %253 = vector.shape_cast %252 : vector<16xf32> to vector<16x1xf32>
    %254 = vector.broadcast %253 : vector<16x1xf32> to vector<16x16xf32>
    %255 = arith.subf %251, %254 : vector<16x16xf32>
    %256 = math.exp %255 : vector<16x16xf32>
    %cst_151 = arith.constant dense<0.000000e+00> : vector<16xf32>
    %257 = vector.multi_reduction <add>, %256, %cst_151 [1] : vector<16x16xf32> to vector<16xf32>
    %258 = vector.shape_cast %257 : vector<16xf32> to vector<16x1xf32>
    %259 = tpu.reciprocal %258 {approx = true} : vector<16x1xf32> -> vector<16x1xf32>
    %260 = vector.broadcast %259 : vector<16x1xf32> to vector<16x16xf32>
    %261 = arith.mulf %256, %260 : vector<16x16xf32>
    %cst_152 = arith.constant dense<0.000000e+00> : vector<16x8xf32>
    %262 = tpu.matmul %261, %247, %cst_152 {dimension_numbers = #tpu.dot_dimension_numbers<[1], [0], [0], [1], [0, 0, 1, 1], [], []>} : vector<16x16xf32>, vector<16x8xf32>, vector<16x8xf32> -> vector<16x8xf32>
    %263 = vector.extract_strided_slice %197 {offsets = [8, 0], sizes = [8, 32], strides = [1, 1]} : vector<32x32xf32> to vector<8x32xf32>
    %cst_153 = arith.constant dense<0.000000e+00> : vector<16x32xf32>
    %264 = tpu.matmul %262, %263, %cst_153 {dimension_numbers = #tpu.dot_dimension_numbers<[1], [0], [0], [1], [0, 0, 1, 1], [], []>} : vector<16x8xf32>, vector<8x32xf32>, vector<16x32xf32> -> vector<16x32xf32>
    %265 = arith.addf %244, %264 : vector<16x32xf32>
    %266 = vector.extract_strided_slice %218 {offsets = [0, 16], sizes = [16, 8], strides = [1, 1]} : vector<16x32xf32> to vector<16x8xf32>
    %267 = vector.extract_strided_slice %221 {offsets = [0, 16], sizes = [16, 8], strides = [1, 1]} : vector<16x32xf32> to vector<16x8xf32>
    %268 = vector.extract_strided_slice %224 {offsets = [0, 16], sizes = [16, 8], strides = [1, 1]} : vector<16x32xf32> to vector<16x8xf32>
    %cst_154 = arith.constant dense<0.000000e+00> : vector<16x16xf32>
    %269 = tpu.matmul %266, %267, %cst_154 {dimension_numbers = #tpu.dot_dimension_numbers<[1], [1], [0], [0], [0, 0, 1, 0], [], []>} : vector<16x8xf32>, vector<16x8xf32>, vector<16x16xf32> -> vector<16x16xf32>
    %cst_155 = arith.constant 2.500000e-01 : f32
    %270 = vector.broadcast %cst_155 : f32 to vector<16x16xf32>
    %271 = arith.mulf %269, %270 : vector<16x16xf32>
    %272 = arith.addf %271, %1 : vector<16x16xf32>
    %cst_156 = arith.constant dense<0xFF800000> : vector<16xf32>
    %273 = vector.multi_reduction <maximumf>, %272, %cst_156 [1] : vector<16x16xf32> to vector<16xf32>
    %274 = vector.shape_cast %273 : vector<16xf32> to vector<16x1xf32>
    %275 = vector.broadcast %274 : vector<16x1xf32> to vector<16x16xf32>
    %276 = arith.subf %272, %275 : vector<16x16xf32>
    %277 = math.exp %276 : vector<16x16xf32>
    %cst_157 = arith.constant dense<0.000000e+00> : vector<16xf32>
    %278 = vector.multi_reduction <add>, %277, %cst_157 [1] : vector<16x16xf32> to vector<16xf32>
    %279 = vector.shape_cast %278 : vector<16xf32> to vector<16x1xf32>
    %280 = tpu.reciprocal %279 {approx = true} : vector<16x1xf32> -> vector<16x1xf32>
    %281 = vector.broadcast %280 : vector<16x1xf32> to vector<16x16xf32>
    %282 = arith.mulf %277, %281 : vector<16x16xf32>
    %cst_158 = arith.constant dense<0.000000e+00> : vector<16x8xf32>
    %283 = tpu.matmul %282, %268, %cst_158 {dimension_numbers = #tpu.dot_dimension_numbers<[1], [0], [0], [1], [0, 0, 1, 1], [], []>} : vector<16x16xf32>, vector<16x8xf32>, vector<16x8xf32> -> vector<16x8xf32>
    %284 = vector.extract_strided_slice %197 {offsets = [16, 0], sizes = [8, 32], strides = [1, 1]} : vector<32x32xf32> to vector<8x32xf32>
    %cst_159 = arith.constant dense<0.000000e+00> : vector<16x32xf32>
    %285 = tpu.matmul %283, %284, %cst_159 {dimension_numbers = #tpu.dot_dimension_numbers<[1], [0], [0], [1], [0, 0, 1, 1], [], []>} : vector<16x8xf32>, vector<8x32xf32>, vector<16x32xf32> -> vector<16x32xf32>
    %286 = arith.addf %265, %285 : vector<16x32xf32>
    %287 = vector.extract_strided_slice %218 {offsets = [0, 24], sizes = [16, 8], strides = [1, 1]} : vector<16x32xf32> to vector<16x8xf32>
    %288 = vector.extract_strided_slice %221 {offsets = [0, 24], sizes = [16, 8], strides = [1, 1]} : vector<16x32xf32> to vector<16x8xf32>
    %289 = vector.extract_strided_slice %224 {offsets = [0, 24], sizes = [16, 8], strides = [1, 1]} : vector<16x32xf32> to vector<16x8xf32>
    %cst_160 = arith.constant dense<0.000000e+00> : vector<16x16xf32>
    %290 = tpu.matmul %287, %288, %cst_160 {dimension_numbers = #tpu.dot_dimension_numbers<[1], [1], [0], [0], [0, 0, 1, 0], [], []>} : vector<16x8xf32>, vector<16x8xf32>, vector<16x16xf32> -> vector<16x16xf32>
    %cst_161 = arith.constant 2.500000e-01 : f32
    %291 = vector.broadcast %cst_161 : f32 to vector<16x16xf32>
    %292 = arith.mulf %290, %291 : vector<16x16xf32>
    %293 = arith.addf %292, %1 : vector<16x16xf32>
    %cst_162 = arith.constant dense<0xFF800000> : vector<16xf32>
    %294 = vector.multi_reduction <maximumf>, %293, %cst_162 [1] : vector<16x16xf32> to vector<16xf32>
    %295 = vector.shape_cast %294 : vector<16xf32> to vector<16x1xf32>
    %296 = vector.broadcast %295 : vector<16x1xf32> to vector<16x16xf32>
    %297 = arith.subf %293, %296 : vector<16x16xf32>
    %298 = math.exp %297 : vector<16x16xf32>
    %cst_163 = arith.constant dense<0.000000e+00> : vector<16xf32>
    %299 = vector.multi_reduction <add>, %298, %cst_163 [1] : vector<16x16xf32> to vector<16xf32>
    %300 = vector.shape_cast %299 : vector<16xf32> to vector<16x1xf32>
    %301 = tpu.reciprocal %300 {approx = true} : vector<16x1xf32> -> vector<16x1xf32>
    %302 = vector.broadcast %301 : vector<16x1xf32> to vector<16x16xf32>
    %303 = arith.mulf %298, %302 : vector<16x16xf32>
    %cst_164 = arith.constant dense<0.000000e+00> : vector<16x8xf32>
    %304 = tpu.matmul %303, %289, %cst_164 {dimension_numbers = #tpu.dot_dimension_numbers<[1], [0], [0], [1], [0, 0, 1, 1], [], []>} : vector<16x16xf32>, vector<16x8xf32>, vector<16x8xf32> -> vector<16x8xf32>
    %305 = vector.extract_strided_slice %197 {offsets = [24, 0], sizes = [8, 32], strides = [1, 1]} : vector<32x32xf32> to vector<8x32xf32>
    %cst_165 = arith.constant dense<0.000000e+00> : vector<16x32xf32>
    %306 = tpu.matmul %304, %305, %cst_165 {dimension_numbers = #tpu.dot_dimension_numbers<[1], [0], [0], [1], [0, 0, 1, 1], [], []>} : vector<16x8xf32>, vector<8x32xf32>, vector<16x32xf32> -> vector<16x32xf32>
    %307 = arith.addf %286, %306 : vector<16x32xf32>
    %308 = vector.broadcast %199 : vector<1x32xf32> to vector<16x32xf32>
    %309 = arith.addf %307, %308 : vector<16x32xf32>
    %310 = arith.addf %309, %183 : vector<16x32xf32>
    %cst_166 = arith.constant dense<0.000000e+00> : vector<16xf32>
    %311 = vector.multi_reduction <add>, %310, %cst_166 [1] : vector<16x32xf32> to vector<16xf32>
    %312 = vector.shape_cast %311 : vector<16xf32> to vector<16x1xf32>
    %cst_167 = arith.constant 3.200000e+01 : f32
    %313 = vector.broadcast %cst_167 : f32 to vector<16x1xf32>
    %314 = arith.divf %312, %313 : vector<16x1xf32>
    %315 = vector.broadcast %314 : vector<16x1xf32> to vector<16x32xf32>
    %316 = arith.subf %310, %315 : vector<16x32xf32>
    %317 = arith.mulf %316, %316 : vector<16x32xf32>
    %cst_168 = arith.constant dense<0.000000e+00> : vector<16xf32>
    %318 = vector.multi_reduction <add>, %317, %cst_168 [1] : vector<16x32xf32> to vector<16xf32>
    %319 = vector.shape_cast %318 : vector<16xf32> to vector<16x1xf32>
    %cst_169 = arith.constant 3.200000e+01 : f32
    %320 = vector.broadcast %cst_169 : f32 to vector<16x1xf32>
    %321 = arith.divf %319, %320 : vector<16x1xf32>
    %cst_170 = arith.constant 9.99999974E-6 : f32
    %322 = vector.broadcast %cst_170 : f32 to vector<16x1xf32>
    %323 = arith.addf %321, %322 : vector<16x1xf32>
    %324 = math.rsqrt %323 : vector<16x1xf32>
    %325 = vector.broadcast %324 : vector<16x1xf32> to vector<16x32xf32>
    %326 = arith.mulf %316, %325 : vector<16x32xf32>
    %327 = vector.broadcast %201 : vector<1x32xf32> to vector<16x32xf32>
    %328 = arith.mulf %326, %327 : vector<16x32xf32>
    %329 = vector.broadcast %203 : vector<1x32xf32> to vector<16x32xf32>
    %330 = arith.addf %328, %329 : vector<16x32xf32>
    %cst_171 = arith.constant dense<0.000000e+00> : vector<16x128xf32>
    %331 = tpu.matmul %330, %205, %cst_171 {dimension_numbers = #tpu.dot_dimension_numbers<[1], [0], [0], [1], [0, 0, 1, 1], [], []>} : vector<16x32xf32>, vector<32x128xf32>, vector<16x128xf32> -> vector<16x128xf32>
    %332 = vector.broadcast %207 : vector<1x128xf32> to vector<16x128xf32>
    %333 = arith.addf %331, %332 : vector<16x128xf32>
    %cst_172 = arith.constant 5.000000e-01 : f32
    %334 = vector.broadcast %cst_172 : f32 to vector<16x128xf32>
    %335 = arith.mulf %334, %333 : vector<16x128xf32>
    %cst_173 = arith.constant 0.707106769 : f32
    %336 = vector.broadcast %cst_173 : f32 to vector<16x128xf32>
    %337 = arith.mulf %333, %336 : vector<16x128xf32>
    %338 = math.erf %337 : vector<16x128xf32>
    %cst_174 = arith.constant 1.000000e+00 : f32
    %339 = vector.broadcast %cst_174 : f32 to vector<16x128xf32>
    %340 = arith.addf %339, %338 : vector<16x128xf32>
    %341 = arith.mulf %335, %340 : vector<16x128xf32>
    %cst_175 = arith.constant dense<0.000000e+00> : vector<16x32xf32>
    %342 = tpu.matmul %341, %209, %cst_175 {dimension_numbers = #tpu.dot_dimension_numbers<[1], [0], [0], [1], [0, 0, 1, 1], [], []>} : vector<16x128xf32>, vector<128x32xf32>, vector<16x32xf32> -> vector<16x32xf32>
    %343 = vector.broadcast %211 : vector<1x32xf32> to vector<16x32xf32>
    %344 = arith.addf %342, %343 : vector<16x32xf32>
    %345 = arith.addf %344, %330 : vector<16x32xf32>
    %cst_176 = arith.constant dense<0.000000e+00> : vector<16xf32>
    %346 = vector.multi_reduction <add>, %345, %cst_176 [1] : vector<16x32xf32> to vector<16xf32>
    %347 = vector.shape_cast %346 : vector<16xf32> to vector<16x1xf32>
    %cst_177 = arith.constant 3.200000e+01 : f32
    %348 = vector.broadcast %cst_177 : f32 to vector<16x1xf32>
    %349 = arith.divf %347, %348 : vector<16x1xf32>
    %350 = vector.broadcast %349 : vector<16x1xf32> to vector<16x32xf32>
    %351 = arith.subf %345, %350 : vector<16x32xf32>
    %352 = arith.mulf %351, %351 : vector<16x32xf32>
    %cst_178 = arith.constant dense<0.000000e+00> : vector<16xf32>
    %353 = vector.multi_reduction <add>, %352, %cst_178 [1] : vector<16x32xf32> to vector<16xf32>
    %354 = vector.shape_cast %353 : vector<16xf32> to vector<16x1xf32>
    %cst_179 = arith.constant 3.200000e+01 : f32
    %355 = vector.broadcast %cst_179 : f32 to vector<16x1xf32>
    %356 = arith.divf %354, %355 : vector<16x1xf32>
    %cst_180 = arith.constant 9.99999974E-6 : f32
    %357 = vector.broadcast %cst_180 : f32 to vector<16x1xf32>
    %358 = arith.addf %356, %357 : vector<16x1xf32>
    %359 = math.rsqrt %358 : vector<16x1xf32>
    %360 = vector.broadcast %359 : vector<16x1xf32> to vector<16x32xf32>
    %361 = arith.mulf %351, %360 : vector<16x32xf32>
    %362 = vector.broadcast %213 : vector<1x32xf32> to vector<16x32xf32>
    %363 = arith.mulf %361, %362 : vector<16x32xf32>
    %364 = vector.broadcast %215 : vector<1x32xf32> to vector<16x32xf32>
    %365 = arith.addf %363, %364 : vector<16x32xf32>
    %c0_181 = arith.constant 0 : index
    %c0_182 = arith.constant 0 : index
    %366 = vector.load %arg18[%c0_181, %c0_182] : memref<16x32xf32, #tpu.memory_space<vmem>>, vector<16x32xf32>
    tpu.vector_store %arg18[%c0_181, %c0_182], %365 {strides = array<i32>} : memref<16x32xf32, #tpu.memory_space<vmem>>, vector<16x32xf32>,
    return
  }
}

</mosaic_0001>

<llo_original>
// kernel: eq.8
$region0: #{eq.8}
  %s0 = inlined_call_operand.vmem [shape: s32[2,8], index: 0, kind: input, shape index: {}]
  %s1 = inlined_call_operand.vmem [shape: s32[16], index: 1, kind: output, shape index: {}]
  $region1: #{eq.8} parent=0
    #allocation0 [shape = 'u8[4096]{0}', space=vmem, size = 0x1000, scoped, tag = 'scoped mem for output reshape']
    #allocation1 [shape = 'u8[4096]{0}', space=vmem, size = 0x1000, scoped, tag = 'scoped mem for input reshape']
    %s3 = ssub.s32 4, 1
    %v4 = vld [vmem:[%s0] sm:%s3]
    %5 = vst [vmem:[#allocation1] sm:%s3] %v4
    %v6 = vld [vmem:[#allocation1] sm:$0x1]
    %vm7 = vcmask 64512
    %8 = vst.msk [vmem:[#allocation0] sm:$0x1] %vm7, %v6
    %s9 = scalar_lea.vmem [#allocation1], 1
    %v10 = vld [vmem:[%s9] sm:$0x1]
    %11 = vrot.lane.b32.xlu0 %v10, 8
    %v12 = vpop.permute.xlu0 %11
    %vm13 = vcmask 130112
    %14 = vst.msk [vmem:[#allocation0] sm:$0x1] %vm13, %v12
    %s16 = ssub.s32 2, 1
    %v17 = vld [vmem:[#allocation0] sm:%s16]
    %s19 = ssub.s32 2, 1
    %20 = vst [vmem:[%s1] sm:%s19] %v17

// kernel: transformer_forward.1
$region0: #{transformer_forward.1}
  #allocation0 [shape = 'u32[]', space=smem, size = 0x4, offset = 0x4, fixed_abs, tag = 'smem constant byte address 0x4 - core index']
  #allocation1 [shape = 'u32[72,128]{1,0:T(1,128)}', space=vmem, size = 0x9000, scoped, tag = 'internal scratch']
  %s0 = inlined_call_operand.vmem [shape: f32[16,32], index: 0, kind: input, shape index: {}]
  %s1 = inlined_call_operand.vmem [shape: f32[16,16], index: 1, kind: input, shape index: {}]
  %s2 = inlined_call_operand.vmem [shape: f32[2,32,32], index: 2, kind: input, shape index: {}]
  %s3 = inlined_call_operand.vmem [shape: f32[2,1,32], index: 3, kind: input, shape index: {}]
  %s4 = inlined_call_operand.vmem [shape: f32[2,32,32], index: 4, kind: input, shape index: {}]
  %s5 = inlined_call_operand.vmem [shape: f32[2,1,32], index: 5, kind: input, shape index: {}]
  %s6 = inlined_call_operand.vmem [shape: f32[2,32,32], index: 6, kind: input, shape index: {}]
  %s7 = inlined_call_operand.vmem [shape: f32[2,1,32], index: 7, kind: input, shape index: {}]
  %s8 = inlined_call_operand.vmem [shape: f32[2,32,32], index: 8, kind: input, shape index: {}]
  %s9 = inlined_call_operand.vmem [shape: f32[2,1,32], index: 9, kind: input, shape index: {}]
  %s10 = inlined_call_operand.vmem [shape: f32[2,1,32], index: 10, kind: input, shape index: {}]
  %s11 = inlined_call_operand.vmem [shape: f32[2,1,32], index: 11, kind: input, shape index: {}]
  %s12 = inlined_call_operand.vmem [shape: f32[2,32,128], index: 12, kind: input, shape index: {}]
  %s13 = inlined_call_operand.vmem [shape: f32[2,1,128], index: 13, kind: input, shape index: {}]
  %s14 = inlined_call_operand.vmem [shape: f32[2,128,32], index: 14, kind: input, shape index: {}]
  %s15 = inlined_call_operand.hbm [shape: f32[2,1,32], index: 15, kind: input, shape index: {}]
  %s16 = inlined_call_operand.vmem [shape: f32[2,1,32], index: 16, kind: input, shape index: {}]
  %s17 = inlined_call_operand.vmem [shape: f32[2,1,32], index: 17, kind: input, shape index: {}]
  %s18 = inlined_call_operand.vmem [shape: f32[16,32], index: 18, kind: output, shape index: {}]
  %s19 = sld [smem:[#allocation0]]
  $region86: #{transformer_forward.1} parent=0
    _
  %s21 = ssub.s32 1, %s19
  %s22 = scalar_select 0, %s21, %s19
  $region1: #{transformer_forward.1} parent=0
    #allocation2 [shape = 'u8[1024]{0}', space=vmem, size = 0x400, scoped, tag = 'input window, operand 15, single buffered']
    #allocation3 [shape = 's32[1]{0}', space=sflag, size = 0x4, scoped, tag = 'scoped memory for transformer_forward.1']
    %23 = vsyncpa [#allocation3], 0
    // Predicated region
    $region2: #{transformer_forward.1} parent=1 // pred_check
      _
    $region3: #{transformer_forward.1} parent=1 // pred_check_branch
      %25 = sbr.rel (0) target = $region5
    $region4: #{transformer_forward.1} parent=1 // pred_region
      _
    $region5: #{transformer_forward.1} parent=1 // pred_fallthru
      _
    // Predicated region
    $region6: #{transformer_forward.1} parent=1 // pred_check
      _
    $region7: #{transformer_forward.1} parent=1 // pred_check_branch
      %27 = sbr.rel (0) target = $region9
    $region8: #{transformer_forward.1} parent=1 // pred_region
      _
    $region9: #{transformer_forward.1} parent=1 // pred_fallthru
      _
    // Predicated region
    $region10: #{transformer_forward.1} parent=1 // pred_check
      _
    $region11: #{transformer_forward.1} parent=1 // pred_check_branch
      %29 = sbr.rel (0) target = $region13
    $region12: #{transformer_forward.1} parent=1 // pred_region
      _
    $region13: #{transformer_forward.1} parent=1 // pred_fallthru
      _
    // Predicated region
    $region14: #{transformer_forward.1} parent=1 // pred_check
      _
    $region15: #{transformer_forward.1} parent=1 // pred_check_branch
      %31 = sbr.rel (0) target = $region17
    $region16: #{transformer_forward.1} parent=1 // pred_region
      _
    $region17: #{transformer_forward.1} parent=1 // pred_fallthru
      _
    // Predicated region
    $region18: #{transformer_forward.1} parent=1 // pred_check
      _
    $region19: #{transformer_forward.1} parent=1 // pred_check_branch
      %33 = sbr.rel (0) target = $region21
    $region20: #{transformer_forward.1} parent=1 // pred_region
      _
    $region21: #{transformer_forward.1} parent=1 // pred_fallthru
      _
    // Predicated region
    $region22: #{transformer_forward.1} parent=1 // pred_check
      _
    $region23: #{transformer_forward.1} parent=1 // pred_check_branch
      %35 = sbr.rel (0) target = $region25
    $region24: #{transformer_forward.1} parent=1 // pred_region
      _
    $region25: #{transformer_forward.1} parent=1 // pred_fallthru
      _
    // Predicated region
    $region26: #{transformer_forward.1} parent=1 // pred_check
      _
    $region27: #{transformer_forward.1} parent=1 // pred_check_branch
      %37 = sbr.rel (0) target = $region29
    $region28: #{transformer_forward.1} parent=1 // pred_region
      _
    $region29: #{transformer_forward.1} parent=1 // pred_fallthru
      _
    // Predicated region
    $region30: #{transformer_forward.1} parent=1 // pred_check
      _
    $region31: #{transformer_forward.1} parent=1 // pred_check_branch
      %39 = sbr.rel (0) target = $region33
    $region32: #{transformer_forward.1} parent=1 // pred_region
      _
    $region33: #{transformer_forward.1} parent=1 // pred_fallthru
      _
    // Predicated region
    $region34: #{transformer_forward.1} parent=1 // pred_check
      _
    $region35: #{transformer_forward.1} parent=1 // pred_check_branch
      %41 = sbr.rel (0) target = $region37
    $region36: #{transformer_forward.1} parent=1 // pred_region
      _
    $region37: #{transformer_forward.1} parent=1 // pred_fallthru
      _
    // Predicated region
    $region38: #{transformer_forward.1} parent=1 // pred_check
      _
    $region39: #{transformer_forward.1} parent=1 // pred_check_branch
      %43 = sbr.rel (0) target = $region41
    $region40: #{transformer_forward.1} parent=1 // pred_region
      _
    $region41: #{transformer_forward.1} parent=1 // pred_fallthru
      _
    // Predicated region
    $region42: #{transformer_forward.1} parent=1 // pred_check
      _
    $region43: #{transformer_forward.1} parent=1 // pred_check_branch
      %45 = sbr.rel (0) target = $region45
    $region44: #{transformer_forward.1} parent=1 // pred_region
      _
    $region45: #{transformer_forward.1} parent=1 // pred_fallthru
      _
    // Predicated region
    $region46: #{transformer_forward.1} parent=1 // pred_check
      _
    $region47: #{transformer_forward.1} parent=1 // pred_check_branch
      %47 = sbr.rel (0) target = $region49
    $region48: #{transformer_forward.1} parent=1 // pred_region
      _
    $region49: #{transformer_forward.1} parent=1 // pred_fallthru
      _
    // Predicated region
    $region50: #{transformer_forward.1} parent=1 // pred_check
      _
    $region51: #{transformer_forward.1} parent=1 // pred_check_branch
      %49 = sbr.rel (0) target = $region53
    $region52: #{transformer_forward.1} parent=1 // pred_region
      _
    $region53: #{transformer_forward.1} parent=1 // pred_fallthru
      _
    // Predicated region
    $region54: #{transformer_forward.1} parent=1 // pred_check
      _
    $region55: #{transformer_forward.1} parent=1 // pred_check_branch
      %51 = sbr.rel (0) target = $region57
    $region56: #{transformer_forward.1} parent=1 // pred_region
      _
    $region57: #{transformer_forward.1} parent=1 // pred_fallthru
      _
    // Predicated region
    $region58: #{transformer_forward.1} parent=1 // pred_check
      _
    $region59: #{transformer_forward.1} parent=1 // pred_check_branch
      %53 = sbr.rel (0) target = $region61
    $region60: #{transformer_forward.1} parent=1 // pred_region
      _
    $region61: #{transformer_forward.1} parent=1 // pred_fallthru
      _
    // Predicated region
    $region62: #{transformer_forward.1} parent=1 // pred_check
      _
    $region63: #{transformer_forward.1} parent=1 // pred_check_branch
      %55 = sbr.rel (0) target = $region65
    $region64: #{transformer_forward.1} parent=1 // pred_region
      %57 = vsyncadd [#allocation3], 0
      %s58 = sshll.u32 %s15, 4
      %s59 = int_to_ptr.hbm [resolvable:$true] %s58
      %s60 = sshll.u32 [#allocation2], 4
      %s61 = int_to_ptr.vmem [resolvable:$true] %s60
      %66 = dma.hbm_to_vmem [thread:$0]  %s59, 32, %s61, [#allocation3], 16, 16, 1
    $region65: #{transformer_forward.1} parent=1 // pred_fallthru
      _
    // Predicated region
    $region66: #{transformer_forward.1} parent=1 // pred_check
      _
    $region67: #{transformer_forward.1} parent=1 // pred_check_branch
      %68 = sbr.rel (0) target = $region69
    $region68: #{transformer_forward.1} parent=1 // pred_region
      _
    $region69: #{transformer_forward.1} parent=1 // pred_fallthru
      _
    // Predicated region
    $region70: #{transformer_forward.1} parent=1 // pred_check
      _
    $region71: #{transformer_forward.1} parent=1 // pred_check_branch
      %70 = sbr.rel (0) target = $region73
    $region72: #{transformer_forward.1} parent=1 // pred_region
      _
    $region73: #{transformer_forward.1} parent=1 // pred_fallthru
      _
    // Predicated region
    $region74: #{transformer_forward.1} parent=1 // pred_check
      _
    $region75: #{transformer_forward.1} parent=1 // pred_check_branch
      %72 = sbr.rel (0) target = $region77
    $region76: #{transformer_forward.1} parent=1 // pred_region
      %74 = dma.done [#allocation3], 32
    $region77: #{transformer_forward.1} parent=1 // pred_fallthru
      _
    %v75 = vld [vmem:[%s0] sm:$0xff]
    %v76 = vld [vmem:[%s0 + $0x8] sm:$0xff]
    %v77 = vld [vmem:[%s1] sm:$0xff]
    %v78 = vld [vmem:[%s1 + $0x8] sm:$0xff]
    %v79 = vld [vmem:[%s2] sm:$0xff]
    %v80 = vld [vmem:[%s2 + $0x8] sm:$0xff]
    %v81 = vld [vmem:[%s2 + $0x10] sm:$0xff]
    %v82 = vld [vmem:[%s2 + $0x18] sm:$0xff]
    %v83 = vld [vmem:[%s3] sm:$0x1]
    %v84 = vld [vmem:[%s4] sm:$0xff]
    %v85 = vld [vmem:[%s4 + $0x8] sm:$0xff]
    %v86 = vld [vmem:[%s4 + $0x10] sm:$0xff]
    %v87 = vld [vmem:[%s4 + $0x18] sm:$0xff]
    %v88 = vld [vmem:[%s5] sm:$0x1]
    %v89 = vld [vmem:[%s6] sm:$0xff]
    %v90 = vld [vmem:[%s6 + $0x8] sm:$0xff]
    %v91 = vld [vmem:[%s6 + $0x10] sm:$0xff]
    %v92 = vld [vmem:[%s6 + $0x18] sm:$0xff]
    %v93 = vld [vmem:[%s7] sm:$0x1]
    %v94 = vld [vmem:[%s8] sm:$0xff]
    %v95 = vld [vmem:[%s8 + $0x8] sm:$0xff]
    %v96 = vld [vmem:[%s8 + $0x10] sm:$0xff]
    %v97 = vld [vmem:[%s8 + $0x18] sm:$0xff]
    %v98 = vld [vmem:[%s9] sm:$0x1]
    %v99 = vld [vmem:[%s10] sm:$0x1]
    %v100 = vld [vmem:[%s11] sm:$0x1]
    %v101 = vld [vmem:[%s12] sm:$0xff]
    %v102 = vld [vmem:[%s12 + $0x8] sm:$0xff]
    %v103 = vld [vmem:[%s12 + $0x10] sm:$0xff]
    %v104 = vld [vmem:[%s12 + $0x18] sm:$0xff]
    %v105 = vld [vmem:[%s13] sm:$0x1]
    %v106 = vld [vmem:[%s14] sm:$0xff]
    %v107 = vld [vmem:[%s14 + $0x8] sm:$0xff]
    %v108 = vld [vmem:[%s14 + $0x10] sm:$0xff]
    %v109 = vld [vmem:[%s14 + $0x18] sm:$0xff]
    %v110 = vld [vmem:[%s14 + $0x20] sm:$0xff]
    %v111 = vld [vmem:[%s14 + $0x28] sm:$0xff]
    %v112 = vld [vmem:[%s14 + $0x30] sm:$0xff]
    %v113 = vld [vmem:[%s14 + $0x38] sm:$0xff]
    %v114 = vld [vmem:[%s14 + $0x40] sm:$0xff]
    %v115 = vld [vmem:[%s14 + $0x48] sm:$0xff]
    %v116 = vld [vmem:[%s14 + $0x50] sm:$0xff]
    %v117 = vld [vmem:[%s14 + $0x58] sm:$0xff]
    %v118 = vld [vmem:[%s14 + $0x60] sm:$0xff]
    %v119 = vld [vmem:[%s14 + $0x68] sm:$0xff]
    %v120 = vld [vmem:[%s14 + $0x70] sm:$0xff]
    %v121 = vld [vmem:[%s14 + $0x78] sm:$0xff]
    %v122 = vld [vmem:[#allocation2] sm:$0x1]
    %v123 = vld [vmem:[%s16] sm:$0x1]
    %v124 = vld [vmem:[%s17] sm:$0x1]
    %v126 = vperm.slane %v83, 0
    %vm128 = vcmask 261120
    %v130 = vsel %vm128, %v75, 0
    %v133 = vsel %vm128, %v76, 0
    %135 = vmatpush.msra.mxu0 0.0
    %136 = vmatpush.msra.mxu0 0.0
    %137 = vmatpush.msra.mxu0 0.0
    %138 = vmatpush.msra.mxu0 0.0
    %139 = vmatpush.msra.mxu0 0.0
    %140 = vmatpush.msra.mxu0 0.0
    %141 = vmatpush.msra.mxu0 0.0
    %142 = vmatpush.msra.mxu0 0.0
    %143 = vmatpush.msra.mxu0 0.0
    %144 = vmatpush.msra.mxu0 0.0
    %145 = vmatpush.msra.mxu0 0.0
    %146 = vmatpush.msra.mxu0 0.0
    %147 = vmatpush.msra.mxu0 %v82
    %148 = vmatpush.msra.mxu0 %v81
    %149 = vmatpush.msra.mxu0 %v80
    %150 = vmatpush.msra.mxu0 %v79
    %151 = vmatmul.f32.gmra.mxu0 %v130
    %v152 = vpop.f32.mrf.mxu0
    %v153 = vadd.f32 %v126, %v152
    %154 = vmatmul.f32.gmra.mxu0 %v133
    %v155 = vpop.f32.mrf.mxu0
    %v156 = vadd.f32 %v126, %v155
    %157 = vdwg.mxu0
    %v159 = vperm.slane %v88, 0
    %161 = vmatpush.msra.mxu0 0.0
    %162 = vmatpush.msra.mxu0 0.0
    %163 = vmatpush.msra.mxu0 0.0
    %164 = vmatpush.msra.mxu0 0.0
    %165 = vmatpush.msra.mxu0 0.0
    %166 = vmatpush.msra.mxu0 0.0
    %167 = vmatpush.msra.mxu0 0.0
    %168 = vmatpush.msra.mxu0 0.0
    %169 = vmatpush.msra.mxu0 0.0
    %170 = vmatpush.msra.mxu0 0.0
    %171 = vmatpush.msra.mxu0 0.0
    %172 = vmatpush.msra.mxu0 0.0
    %173 = vmatpush.msra.mxu0 %v87
    %174 = vmatpush.msra.mxu0 %v86
    %175 = vmatpush.msra.mxu0 %v85
    %176 = vmatpush.msra.mxu0 %v84
    %177 = vmatmul.f32.gmra.mxu0 %v130
    %v178 = vpop.f32.mrf.mxu0
    %v179 = vadd.f32 %v159, %v178
    %180 = vmatmul.f32.gmra.mxu0 %v133
    %v181 = vpop.f32.mrf.mxu0
    %v182 = vadd.f32 %v159, %v181
    %183 = vdwg.mxu0
    %v185 = vperm.slane %v93, 0
    %187 = vmatpush.msra.mxu0 0.0
    %188 = vmatpush.msra.mxu0 0.0
    %189 = vmatpush.msra.mxu0 0.0
    %190 = vmatpush.msra.mxu0 0.0
    %191 = vmatpush.msra.mxu0 0.0
    %192 = vmatpush.msra.mxu0 0.0
    %193 = vmatpush.msra.mxu0 0.0
    %194 = vmatpush.msra.mxu0 0.0
    %195 = vmatpush.msra.mxu0 0.0
    %196 = vmatpush.msra.mxu0 0.0
    %197 = vmatpush.msra.mxu0 0.0
    %198 = vmatpush.msra.mxu0 0.0
    %199 = vmatpush.msra.mxu0 %v92
    %200 = vmatpush.msra.mxu0 %v91
    %201 = vmatpush.msra.mxu0 %v90
    %202 = vmatpush.msra.mxu0 %v89
    %203 = vmatmul.f32.gmra.mxu0 %v130
    %v204 = vpop.f32.mrf.mxu0
    %v205 = vadd.f32 %v185, %v204
    %206 = vmatmul.f32.gmra.mxu0 %v133
    %v207 = vpop.f32.mrf.mxu0
    %v208 = vadd.f32 %v185, %v207
    %209 = vdwg.mxu0
    %vm210 = vcmask 64512
    %v212 = vsel %vm210, %v153, 0
    %v215 = vsel %vm210, %v156, 0
    %v218 = vsel %vm210, %v179, 0
    %v221 = vsel %vm210, %v182, 0
    %223 = vmatpush.xpose.msra.mxu0 0.0
    %224 = vmatpush.xpose.msra.mxu0 0.0
    %225 = vmatpush.xpose.msra.mxu0 0.0
    %226 = vmatpush.xpose.msra.mxu0 0.0
    %227 = vmatpush.xpose.msra.mxu0 0.0
    %228 = vmatpush.xpose.msra.mxu0 0.0
    %229 = vmatpush.xpose.msra.mxu0 0.0
    %230 = vmatpush.xpose.msra.mxu0 0.0
    %231 = vmatpush.xpose.msra.mxu0 0.0
    %232 = vmatpush.xpose.msra.mxu0 0.0
    %233 = vmatpush.xpose.msra.mxu0 0.0
    %234 = vmatpush.xpose.msra.mxu0 0.0
    %235 = vmatpush.xpose.msra.mxu0 0.0
    %236 = vmatpush.xpose.msra.mxu0 0.0
    %237 = vmatpush.xpose.msra.mxu0 %v221
    %238 = vmatpush.xpose.msra.mxu0 %v218
    %239 = vmatmul.f32.gmra.mxu0 %v212
    %v240 = vpop.f32.mrf.mxu0
    %v241 = vadd.f32 0.0, %v240
    %242 = vmatmul.f32.gmra.mxu0 %v215
    %v243 = vpop.f32.mrf.mxu0
    %v244 = vadd.f32 0.0, %v243
    %245 = vdwg.mxu0
    %v246 = vmul.f32 %v241, 0.25
    %v247 = vmul.f32 %v244, 0.25
    %v248 = vadd.f32 %v246, %v77
    %v249 = vadd.f32 %v247, %v78
    %vm250 = vcmask 130048
    %v251 = vsel %vm250, %v248, -inf
    %252 = vmax.xlane.f32.xlu0 %v251
    %v253 = vpop.xlane.xlu0 %252
    %v254 = vsel %vm250, %v249, -inf
    %255 = vmax.xlane.f32.xlu0 %v254
    %v256 = vpop.xlane.xlu0 %255
    %v257 = vsub.f32 %v248, %v253
    %v258 = vsub.f32 %v249, %v256
    %v259 = vmul.f32 %v257, 1.442695
    %v260 = vpow.pop %v259
    %v261 = vmul.f32 %v258, 1.442695
    %v262 = vpow.pop %v261
    %v263 = vsel %vm250, %v260, 0.0
    %264 = vadd.xlane.f32.xlu0 %v263
    %v265 = vpop.xlane.xlu0 %264
    %v266 = vsel %vm250, %v262, 0.0
    %267 = vadd.xlane.f32.xlu0 %v266
    %v268 = vpop.xlane.xlu0 %267
    %v269 = vrcp.pop %v265
    %v270 = vrcp.pop %v268
    %v271 = vmul.f32 %v260, %v269
    %v272 = vmul.f32 %v262, %v270
    %v274 = vsel %vm250, %v271, 0
    %v277 = vsel %vm250, %v272, 0
    %279 = vmatpush.msra.mxu0 0.0
    %280 = vmatpush.msra.mxu0 0.0
    %281 = vmatpush.msra.mxu0 0.0
    %282 = vmatpush.msra.mxu0 0.0
    %283 = vmatpush.msra.mxu0 0.0
    %284 = vmatpush.msra.mxu0 0.0
    %285 = vmatpush.msra.mxu0 0.0
    %286 = vmatpush.msra.mxu0 0.0
    %287 = vmatpush.msra.mxu0 0.0
    %288 = vmatpush.msra.mxu0 0.0
    %289 = vmatpush.msra.mxu0 0.0
    %290 = vmatpush.msra.mxu0 0.0
    %291 = vmatpush.msra.mxu0 0.0
    %292 = vmatpush.msra.mxu0 0.0
    %293 = vmatpush.msra.mxu0 %v208
    %294 = vmatpush.msra.mxu0 %v205
    %295 = vmatmul.f32.gmra.mxu0 %v274
    %v296 = vpop.f32.mrf.mxu0
    %v297 = vadd.f32 0.0, %v296
    %298 = vmatmul.f32.gmra.mxu0 %v277
    %v299 = vpop.f32.mrf.mxu0
    %v300 = vadd.f32 0.0, %v299
    %301 = vdwg.mxu0
    %302 = vrot.lane.b32.xlu0 %v153, 120
    %v303 = vpop.permute.xlu0 %302
    %304 = vrot.lane.b32.xlu0 %v156, 120
    %v305 = vpop.permute.xlu0 %304
    %306 = vrot.lane.b32.xlu0 %v179, 120
    %v307 = vpop.permute.xlu0 %306
    %308 = vrot.lane.b32.xlu0 %v182, 120
    %v309 = vpop.permute.xlu0 %308
    %v310 = vsel %vm210, %v303, 0
    %v312 = vsel %vm210, %v305, 0
    %v314 = vsel %vm210, %v307, 0
    %v316 = vsel %vm210, %v309, 0
    %318 = vmatpush.xpose.msra.mxu0 0.0
    %319 = vmatpush.xpose.msra.mxu0 0.0
    %320 = vmatpush.xpose.msra.mxu0 0.0
    %321 = vmatpush.xpose.msra.mxu0 0.0
    %322 = vmatpush.xpose.msra.mxu0 0.0
    %323 = vmatpush.xpose.msra.mxu0 0.0
    %324 = vmatpush.xpose.msra.mxu0 0.0
    %325 = vmatpush.xpose.msra.mxu0 0.0
    %326 = vmatpush.xpose.msra.mxu0 0.0
    %327 = vmatpush.xpose.msra.mxu0 0.0
    %328 = vmatpush.xpose.msra.mxu0 0.0
    %329 = vmatpush.xpose.msra.mxu0 0.0
    %330 = vmatpush.xpose.msra.mxu0 0.0
    %331 = vmatpush.xpose.msra.mxu0 0.0
    %332 = vmatpush.xpose.msra.mxu0 %v316
    %333 = vmatpush.xpose.msra.mxu0 %v314
    %334 = vmatmul.f32.gmra.mxu0 %v310
    %v335 = vpop.f32.mrf.mxu0
    %v336 = vadd.f32 0.0, %v335
    %337 = vmatmul.f32.gmra.mxu0 %v312
    %v338 = vpop.f32.mrf.mxu0
    %v339 = vadd.f32 0.0, %v338
    %340 = vdwg.mxu0
    %v341 = vmul.f32 %v336, 0.25
    %v342 = vmul.f32 %v339, 0.25
    %v343 = vadd.f32 %v341, %v77
    %v344 = vadd.f32 %v342, %v78
    %v345 = vsel %vm250, %v343, -inf
    %346 = vmax.xlane.f32.xlu0 %v345
    %v347 = vpop.xlane.xlu0 %346
    %v348 = vsel %vm250, %v344, -inf
    %349 = vmax.xlane.f32.xlu0 %v348
    %v350 = vpop.xlane.xlu0 %349
    %v351 = vsub.f32 %v343, %v347
    %v352 = vsub.f32 %v344, %v350
    %v353 = vmul.f32 %v351, 1.442695
    %v354 = vpow.pop %v353
    %v355 = vmul.f32 %v352, 1.442695
    %v356 = vpow.pop %v355
    %v357 = vsel %vm250, %v354, 0.0
    %358 = vadd.xlane.f32.xlu0 %v357
    %v359 = vpop.xlane.xlu0 %358
    %v360 = vsel %vm250, %v356, 0.0
    %361 = vadd.xlane.f32.xlu0 %v360
    %v362 = vpop.xlane.xlu0 %361
    %v363 = vrcp.pop %v359
    %v364 = vrcp.pop %v362
    %v365 = vmul.f32 %v354, %v363
    %v366 = vmul.f32 %v356, %v364
    %369 = vrot.lane.b32.xlu0 %v205, 120
    %v370 = vpop.permute.xlu0 %369
    %371 = vrot.lane.b32.xlu0 %v208, 120
    %v372 = vpop.permute.xlu0 %371
    %v376 = vsel %vm250, %v365, 0
    %v379 = vsel %vm250, %v366, 0
    %381 = vmatpush.msra.mxu0 0.0
    %382 = vmatpush.msra.mxu0 0.0
    %383 = vmatpush.msra.mxu0 0.0
    %384 = vmatpush.msra.mxu0 0.0
    %385 = vmatpush.msra.mxu0 0.0
    %386 = vmatpush.msra.mxu0 0.0
    %387 = vmatpush.msra.mxu0 0.0
    %388 = vmatpush.msra.mxu0 0.0
    %389 = vmatpush.msra.mxu0 0.0
    %390 = vmatpush.msra.mxu0 0.0
    %391 = vmatpush.msra.mxu0 0.0
    %392 = vmatpush.msra.mxu0 0.0
    %393 = vmatpush.msra.mxu0 0.0
    %394 = vmatpush.msra.mxu0 0.0
    %395 = vmatpush.msra.mxu0 %v372
    %396 = vmatpush.msra.mxu0 %v370
    %397 = vmatmul.f32.gmra.mxu0 %v376
    %v398 = vpop.f32.mrf.mxu0
    %v399 = vadd.f32 0.0, %v398
    %400 = vmatmul.f32.gmra.mxu0 %v379
    %v401 = vpop.f32.mrf.mxu0
    %v402 = vadd.f32 0.0, %v401
    %403 = vdwg.mxu0
    %v405 = vsel %vm210, %v399, 0
    %v408 = vsel %vm210, %v402, 0
    %410 = vmatpush.msra.mxu0 0.0
    %411 = vmatpush.msra.mxu0 0.0
    %412 = vmatpush.msra.mxu0 0.0
    %413 = vmatpush.msra.mxu0 0.0
    %414 = vmatpush.msra.mxu0 0.0
    %415 = vmatpush.msra.mxu0 0.0
    %416 = vmatpush.msra.mxu0 0.0
    %417 = vmatpush.msra.mxu0 0.0
    %418 = vmatpush.msra.mxu0 0.0
    %419 = vmatpush.msra.mxu0 0.0
    %420 = vmatpush.msra.mxu0 0.0
    %421 = vmatpush.msra.mxu0 0.0
    %422 = vmatpush.msra.mxu0 0.0
    %423 = vmatpush.msra.mxu0 0.0
    %424 = vmatpush.msra.mxu0 0.0
    %425 = vmatpush.msra.mxu0 %v95
    %426 = vmatmul.f32.gmra.mxu0 %v405
    %v427 = vpop.f32.mrf.mxu0
    %v428 = vadd.f32 0.0, %v427
    %429 = vmatmul.f32.gmra.mxu0 %v408
    %v430 = vpop.f32.mrf.mxu0
    %v431 = vadd.f32 0.0, %v430
    %432 = vdwg.mxu0
    %v434 = vsel %vm210, %v297, 0
    %v437 = vsel %vm210, %v300, 0
    %439 = vmatpush.msra.mxu0 0.0
    %440 = vmatpush.msra.mxu0 0.0
    %441 = vmatpush.msra.mxu0 0.0
    %442 = vmatpush.msra.mxu0 0.0
    %443 = vmatpush.msra.mxu0 0.0
    %444 = vmatpush.msra.mxu0 0.0
    %445 = vmatpush.msra.mxu0 0.0
    %446 = vmatpush.msra.mxu0 0.0
    %447 = vmatpush.msra.mxu0 0.0
    %448 = vmatpush.msra.mxu0 0.0
    %449 = vmatpush.msra.mxu0 0.0
    %450 = vmatpush.msra.mxu0 0.0
    %451 = vmatpush.msra.mxu0 0.0
    %452 = vmatpush.msra.mxu0 0.0
    %453 = vmatpush.msra.mxu0 0.0
    %454 = vmatpush.msra.mxu0 %v94
    %455 = vmatmul.f32.gmra.mxu0 %v434
    %v456 = vpop.f32.mrf.mxu0
    %v457 = vadd.f32 %v428, %v456
    %458 = vmatmul.f32.gmra.mxu0 %v437
    %v459 = vpop.f32.mrf.mxu0
    %v460 = vadd.f32 %v431, %v459
    %461 = vdwg.mxu0
    %462 = vrot.lane.b32.xlu0 %v153, 112
    %v463 = vpop.permute.xlu0 %462
    %464 = vrot.lane.b32.xlu0 %v156, 112
    %v465 = vpop.permute.xlu0 %464
    %466 = vrot.lane.b32.xlu0 %v179, 112
    %v467 = vpop.permute.xlu0 %466
    %468 = vrot.lane.b32.xlu0 %v182, 112
    %v469 = vpop.permute.xlu0 %468
    %v470 = vsel %vm210, %v463, 0
    %v472 = vsel %vm210, %v465, 0
    %v474 = vsel %vm210, %v467, 0
    %v476 = vsel %vm210, %v469, 0
    %478 = vmatpush.xpose.msra.mxu0 0.0
    %479 = vmatpush.xpose.msra.mxu0 0.0
    %480 = vmatpush.xpose.msra.mxu0 0.0
    %481 = vmatpush.xpose.msra.mxu0 0.0
    %482 = vmatpush.xpose.msra.mxu0 0.0
    %483 = vmatpush.xpose.msra.mxu0 0.0
    %484 = vmatpush.xpose.msra.mxu0 0.0
    %485 = vmatpush.xpose.msra.mxu0 0.0
    %486 = vmatpush.xpose.msra.mxu0 0.0
    %487 = vmatpush.xpose.msra.mxu0 0.0
    %488 = vmatpush.xpose.msra.mxu0 0.0
    %489 = vmatpush.xpose.msra.mxu0 0.0
    %490 = vmatpush.xpose.msra.mxu0 0.0
    %491 = vmatpush.xpose.msra.mxu0 0.0
    %492 = vmatpush.xpose.msra.mxu0 %v476
    %493 = vmatpush.xpose.msra.mxu0 %v474
    %494 = vmatmul.f32.gmra.mxu0 %v470
    %v495 = vpop.f32.mrf.mxu0
    %v496 = vadd.f32 0.0, %v495
    %497 = vmatmul.f32.gmra.mxu0 %v472
    %v498 = vpop.f32.mrf.mxu0
    %v499 = vadd.f32 0.0, %v498
    %500 = vdwg.mxu0
    %v501 = vmul.f32 %v496, 0.25
    %v502 = vmul.f32 %v499, 0.25
    %v503 = vadd.f32 %v501, %v77
    %v504 = vadd.f32 %v502, %v78
    %v505 = vsel %vm250, %v503, -inf
    %506 = vmax.xlane.f32.xlu0 %v505
    %v507 = vpop.xlane.xlu0 %506
    %v508 = vsel %vm250, %v504, -inf
    %509 = vmax.xlane.f32.xlu0 %v508
    %v510 = vpop.xlane.xlu0 %509
    %v511 = vsub.f32 %v503, %v507
    %v512 = vsub.f32 %v504, %v510
    %v513 = vmul.f32 %v511, 1.442695
    %v514 = vpow.pop %v513
    %v515 = vmul.f32 %v512, 1.442695
    %v516 = vpow.pop %v515
    %v517 = vsel %vm250, %v514, 0.0
    %518 = vadd.xlane.f32.xlu0 %v517
    %v519 = vpop.xlane.xlu0 %518
    %v520 = vsel %vm250, %v516, 0.0
    %521 = vadd.xlane.f32.xlu0 %v520
    %v522 = vpop.xlane.xlu0 %521
    %v523 = vrcp.pop %v519
    %v524 = vrcp.pop %v522
    %v525 = vmul.f32 %v514, %v523
    %v526 = vmul.f32 %v516, %v524
    %527 = vrot.lane.b32.xlu0 %v205, 112
    %v528 = vpop.permute.xlu0 %527
    %529 = vrot.lane.b32.xlu0 %v208, 112
    %v530 = vpop.permute.xlu0 %529
    %v534 = vsel %vm250, %v525, 0
    %v537 = vsel %vm250, %v526, 0
    %539 = vmatpush.msra.mxu0 0.0
    %540 = vmatpush.msra.mxu0 0.0
    %541 = vmatpush.msra.mxu0 0.0
    %542 = vmatpush.msra.mxu0 0.0
    %543 = vmatpush.msra.mxu0 0.0
    %544 = vmatpush.msra.mxu0 0.0
    %545 = vmatpush.msra.mxu0 0.0
    %546 = vmatpush.msra.mxu0 0.0
    %547 = vmatpush.msra.mxu0 0.0
    %548 = vmatpush.msra.mxu0 0.0
    %549 = vmatpush.msra.mxu0 0.0
    %550 = vmatpush.msra.mxu0 0.0
    %551 = vmatpush.msra.mxu0 0.0
    %552 = vmatpush.msra.mxu0 0.0
    %553 = vmatpush.msra.mxu0 %v530
    %554 = vmatpush.msra.mxu0 %v528
    %555 = vmatmul.f32.gmra.mxu0 %v534
    %v556 = vpop.f32.mrf.mxu0
    %v557 = vadd.f32 0.0, %v556
    %558 = vmatmul.f32.gmra.mxu0 %v537
    %v559 = vpop.f32.mrf.mxu0
    %v560 = vadd.f32 0.0, %v559
    %561 = vdwg.mxu0
    %v563 = vsel %vm210, %v557, 0
    %v566 = vsel %vm210, %v560, 0
    %568 = vmatpush.msra.mxu0 0.0
    %569 = vmatpush.msra.mxu0 0.0
    %570 = vmatpush.msra.mxu0 0.0
    %571 = vmatpush.msra.mxu0 0.0
    %572 = vmatpush.msra.mxu0 0.0
    %573 = vmatpush.msra.mxu0 0.0
    %574 = vmatpush.msra.mxu0 0.0
    %575 = vmatpush.msra.mxu0 0.0
    %576 = vmatpush.msra.mxu0 0.0
    %577 = vmatpush.msra.mxu0 0.0
    %578 = vmatpush.msra.mxu0 0.0
    %579 = vmatpush.msra.mxu0 0.0
    %580 = vmatpush.msra.mxu0 0.0
    %581 = vmatpush.msra.mxu0 0.0
    %582 = vmatpush.msra.mxu0 0.0
    %583 = vmatpush.msra.mxu0 %v96
    %584 = vmatmul.f32.gmra.mxu0 %v563
    %v585 = vpop.f32.mrf.mxu0
    %v586 = vadd.f32 0.0, %v585
    %587 = vmatmul.f32.gmra.mxu0 %v566
    %v588 = vpop.f32.mrf.mxu0
    %v589 = vadd.f32 0.0, %v588
    %590 = vdwg.mxu0
    %v591 = vadd.f32 %v457, %v586
    %v592 = vadd.f32 %v460, %v589
    %593 = vrot.lane.b32.xlu0 %v153, 104
    %v594 = vpop.permute.xlu0 %593
    %595 = vrot.lane.b32.xlu0 %v156, 104
    %v596 = vpop.permute.xlu0 %595
    %597 = vrot.lane.b32.xlu0 %v179, 104
    %v598 = vpop.permute.xlu0 %597
    %599 = vrot.lane.b32.xlu0 %v182, 104
    %v600 = vpop.permute.xlu0 %599
    %v601 = vsel %vm210, %v594, 0
    %v603 = vsel %vm210, %v596, 0
    %v605 = vsel %vm210, %v598, 0
    %v607 = vsel %vm210, %v600, 0
    %609 = vmatpush.xpose.msra.mxu0 0.0
    %610 = vmatpush.xpose.msra.mxu0 0.0
    %611 = vmatpush.xpose.msra.mxu0 0.0
    %612 = vmatpush.xpose.msra.mxu0 0.0
    %613 = vmatpush.xpose.msra.mxu0 0.0
    %614 = vmatpush.xpose.msra.mxu0 0.0
    %615 = vmatpush.xpose.msra.mxu0 0.0
    %616 = vmatpush.xpose.msra.mxu0 0.0
    %617 = vmatpush.xpose.msra.mxu0 0.0
    %618 = vmatpush.xpose.msra.mxu0 0.0
    %619 = vmatpush.xpose.msra.mxu0 0.0
    %620 = vmatpush.xpose.msra.mxu0 0.0
    %621 = vmatpush.xpose.msra.mxu0 0.0
    %622 = vmatpush.xpose.msra.mxu0 0.0
    %623 = vmatpush.xpose.msra.mxu0 %v607
    %624 = vmatpush.xpose.msra.mxu0 %v605
    %625 = vmatmul.f32.gmra.mxu0 %v601
    %v626 = vpop.f32.mrf.mxu0
    %v627 = vadd.f32 0.0, %v626
    %628 = vmatmul.f32.gmra.mxu0 %v603
    %v629 = vpop.f32.mrf.mxu0
    %v630 = vadd.f32 0.0, %v629
    %631 = vdwg.mxu0
    %v632 = vmul.f32 %v627, 0.25
    %v633 = vmul.f32 %v630, 0.25
    %v634 = vadd.f32 %v632, %v77
    %v635 = vadd.f32 %v633, %v78
    %v636 = vsel %vm250, %v634, -inf
    %637 = vmax.xlane.f32.xlu0 %v636
    %v638 = vpop.xlane.xlu0 %637
    %v639 = vsel %vm250, %v635, -inf
    %640 = vmax.xlane.f32.xlu0 %v639
    %v641 = vpop.xlane.xlu0 %640
    %v642 = vsub.f32 %v634, %v638
    %v643 = vsub.f32 %v635, %v641
    %v644 = vmul.f32 %v642, 1.442695
    %v645 = vpow.pop %v644
    %v646 = vmul.f32 %v643, 1.442695
    %v647 = vpow.pop %v646
    %v648 = vsel %vm250, %v645, 0.0
    %649 = vadd.xlane.f32.xlu0 %v648
    %v650 = vpop.xlane.xlu0 %649
    %v651 = vsel %vm250, %v647, 0.0
    %652 = vadd.xlane.f32.xlu0 %v651
    %v653 = vpop.xlane.xlu0 %652
    %v654 = vrcp.pop %v650
    %v655 = vrcp.pop %v653
    %v656 = vmul.f32 %v645, %v654
    %v657 = vmul.f32 %v647, %v655
    %658 = vrot.lane.b32.xlu0 %v205, 104
    %v659 = vpop.permute.xlu0 %658
    %660 = vrot.lane.b32.xlu0 %v208, 104
    %v661 = vpop.permute.xlu0 %660
    %v665 = vsel %vm250, %v656, 0
    %v668 = vsel %vm250, %v657, 0
    %670 = vmatpush.msra.mxu0 0.0
    %671 = vmatpush.msra.mxu0 0.0
    %672 = vmatpush.msra.mxu0 0.0
    %673 = vmatpush.msra.mxu0 0.0
    %674 = vmatpush.msra.mxu0 0.0
    %675 = vmatpush.msra.mxu0 0.0
    %676 = vmatpush.msra.mxu0 0.0
    %677 = vmatpush.msra.mxu0 0.0
    %678 = vmatpush.msra.mxu0 0.0
    %679 = vmatpush.msra.mxu0 0.0
    %680 = vmatpush.msra.mxu0 0.0
    %681 = vmatpush.msra.mxu0 0.0
    %682 = vmatpush.msra.mxu0 0.0
    %683 = vmatpush.msra.mxu0 0.0
    %684 = vmatpush.msra.mxu0 %v661
    %685 = vmatpush.msra.mxu0 %v659
    %686 = vmatmul.f32.gmra.mxu0 %v665
    %v687 = vpop.f32.mrf.mxu0
    %v688 = vadd.f32 0.0, %v687
    %689 = vmatmul.f32.gmra.mxu0 %v668
    %v690 = vpop.f32.mrf.mxu0
    %v691 = vadd.f32 0.0, %v690
    %692 = vdwg.mxu0
    %v694 = vsel %vm210, %v688, 0
    %v697 = vsel %vm210, %v691, 0
    %699 = vmatpush.msra.mxu0 0.0
    %700 = vmatpush.msra.mxu0 0.0
    %701 = vmatpush.msra.mxu0 0.0
    %702 = vmatpush.msra.mxu0 0.0
    %703 = vmatpush.msra.mxu0 0.0
    %704 = vmatpush.msra.mxu0 0.0
    %705 = vmatpush.msra.mxu0 0.0
    %706 = vmatpush.msra.mxu0 0.0
    %707 = vmatpush.msra.mxu0 0.0
    %708 = vmatpush.msra.mxu0 0.0
    %709 = vmatpush.msra.mxu0 0.0
    %710 = vmatpush.msra.mxu0 0.0
    %711 = vmatpush.msra.mxu0 0.0
    %712 = vmatpush.msra.mxu0 0.0
    %713 = vmatpush.msra.mxu0 0.0
    %714 = vmatpush.msra.mxu0 %v97
    %715 = vmatmul.f32.gmra.mxu0 %v694
    %v716 = vpop.f32.mrf.mxu0
    %v717 = vadd.f32 0.0, %v716
    %718 = vmatmul.f32.gmra.mxu0 %v697
    %v719 = vpop.f32.mrf.mxu0
    %v720 = vadd.f32 0.0, %v719
    %721 = vdwg.mxu0
    %v722 = vadd.f32 %v591, %v717
    %v723 = vadd.f32 %v592, %v720
    %v725 = vperm.slane %v98, 0
    %v727 = vadd.f32 %v722, %v725
    %v728 = vadd.f32 %v723, %v725
    %v729 = vadd.f32 %v727, %v75
    %v730 = vadd.f32 %v728, %v76
    %v731 = vsel %vm128, %v729, 0.0
    %732 = vadd.xlane.f32.xlu0 %v731
    %v733 = vpop.xlane.xlu0 %732
    %v734 = vsel %vm128, %v730, 0.0
    %735 = vadd.xlane.f32.xlu0 %v734
    %v736 = vpop.xlane.xlu0 %735
    %v737 = vrcp.pop 32.0
    %v738 = vmul.f32 32.0, %v737
    %v739 = vsub.f32 1.0, %v738
    %v740 = vmul.f32 %v737, %v739
    %v741 = vadd.f32 %v737, %v740
    %vm742 = vweird.f32 %v737
    %v743 = vsel %vm742, %v737, %v741
    %v744 = vmul.f32 %v733, %v743
    %v745 = vmul.f32 %v736, %v743
    %v746 = vsub.f32 %v729, %v744
    %v747 = vsub.f32 %v730, %v745
    %v748 = vmul.f32 %v746, %v746
    %v749 = vmul.f32 %v747, %v747
    %v750 = vsel %vm128, %v748, 0.0
    %751 = vadd.xlane.f32.xlu0 %v750
    %v752 = vpop.xlane.xlu0 %751
    %v753 = vsel %vm128, %v749, 0.0
    %754 = vadd.xlane.f32.xlu0 %v753
    %v755 = vpop.xlane.xlu0 %754
    %v756 = vmul.f32 %v752, %v743
    %v757 = vmul.f32 %v755, %v743
    %v758 = vadd.f32 %v756, 1e-05
    %v759 = vadd.f32 %v757, 1e-05
    %v760 = vrsqrt.pop %v758
    %v761 = vmul.f32 %v760, %v758
    %v762 = vmul.f32 %v761, %v760
    %v763 = vmul.f32 0.5, %v762
    %v764 = vsub.f32 1.5, %v763
    %v765 = vmul.f32 %v760, %v764
    %vm766 = vweird.f32 %v758
    %vm767 = vweird.f32 %v760
    %vm768 = vmor %vm766, %vm767
    %v769 = vsel %vm768, %v760, %v765
    %v770 = vrsqrt.pop %v759
    %v771 = vmul.f32 %v770, %v759
    %v772 = vmul.f32 %v771, %v770
    %v773 = vmul.f32 0.5, %v772
    %v774 = vsub.f32 1.5, %v773
    %v775 = vmul.f32 %v770, %v774
    %vm776 = vweird.f32 %v759
    %vm777 = vweird.f32 %v770
    %vm778 = vmor %vm776, %vm777
    %v779 = vsel %vm778, %v770, %v775
    %v780 = vmul.f32 %v746, %v769
    %v781 = vmul.f32 %v747, %v779
    %v783 = vperm.slane %v99, 0
    %v785 = vmul.f32 %v780, %v783
    %v786 = vmul.f32 %v781, %v783
    %v788 = vperm.slane %v100, 0
    %v790 = vadd.f32 %v785, %v788
    %v791 = vadd.f32 %v786, %v788
    %v793 = vperm.slane %v105, 0
    %v796 = vsel %vm128, %v790, 0
    %v799 = vsel %vm128, %v791, 0
    %801 = vmatpush.msra.mxu0 0.0
    %802 = vmatpush.msra.mxu0 0.0
    %803 = vmatpush.msra.mxu0 0.0
    %804 = vmatpush.msra.mxu0 0.0
    %805 = vmatpush.msra.mxu0 0.0
    %806 = vmatpush.msra.mxu0 0.0
    %807 = vmatpush.msra.mxu0 0.0
    %808 = vmatpush.msra.mxu0 0.0
    %809 = vmatpush.msra.mxu0 0.0
    %810 = vmatpush.msra.mxu0 0.0
    %811 = vmatpush.msra.mxu0 0.0
    %812 = vmatpush.msra.mxu0 0.0
    %813 = vmatpush.msra.mxu0 %v104
    %814 = vmatpush.msra.mxu0 %v103
    %815 = vmatpush.msra.mxu0 %v102
    %816 = vmatpush.msra.mxu0 %v101
    %817 = vmatmul.f32.gmra.mxu0 %v796
    %v818 = vpop.f32.mrf.mxu0
    %v819 = vadd.f32 %v793, %v818
    %820 = vmatmul.f32.gmra.mxu0 %v799
    %v821 = vpop.f32.mrf.mxu0
    %v822 = vadd.f32 %v793, %v821
    %823 = vdwg.mxu0
    %v824 = vmul.f32 %v819, 0.5
    %v825 = vmul.f32 %v822, 0.5
    %v826 = vmul.f32 %v819, 0.70710677
    %v827 = vmul.f32 %v822, 0.70710677
    %v828 = vmul.f32 %v826, %v826
    %v829 = vmin.f32 16.0, %v828
    %v830 = vmul.f32 %v829, 2.1237322e-06
    %v831 = vadd.f32 %v830, 0.00028619796
    %v832 = vmul.f32 %v829, %v831
    %v833 = vadd.f32 %v832, 0.0036580483
    %v834 = vmul.f32 %v829, %v833
    %v835 = vadd.f32 %v834, 0.05243302
    %v836 = vmul.f32 %v829, %v835
    %v837 = vadd.f32 %v836, 0.18741608
    %v838 = vmul.f32 %v829, %v837
    %v839 = vadd.f32 %v838, 1.1283791
    %v840 = vmul.f32 %v826, %v839
    %v841 = vmul.f32 %v829, 3.8918573e-05
    %v842 = vadd.f32 %v841, 0.001143296
    %v843 = vmul.f32 %v829, %v842
    %v844 = vadd.f32 %v843, 0.014752088
    %v845 = vmul.f32 %v829, %v844
    %v846 = vadd.f32 %v845, 0.112945676
    %v847 = vmul.f32 %v829, %v846
    %v848 = vadd.f32 %v847, 0.4994258
    %v849 = vmul.f32 %v829, %v848
    %v850 = vadd.f32 %v849, 1.0
    %v851 = vrcp.pop %v850
    %v852 = vmul.f32 %v850, %v851
    %v853 = vsub.f32 1.0, %v852
    %v854 = vmul.f32 %v851, %v853
    %v855 = vadd.f32 %v851, %v854
    %vm856 = vweird.f32 %v850
    %vm857 = vweird.f32 %v851
    %vm858 = vmor %vm856, %vm857
    %v859 = vsel %vm858, %v851, %v855
    %v860 = vand.u32 2147483647, %v850
    %vm861 = vcmp.eq.f32.partialorder %v860, 8.507059e+37
    %v862 = vand.u32 %v850, 2147483648
    %v863 = vor.u32 1.1754944e-38, %v862
    %v864 = vsel %vm861, %v863, %v859
    %v865 = vmul.f32 %v840, %v864
    %v866 = vmin.f32 %v865, 1.0
    %v867 = vmax.f32 %v866, -1.0
    %v868 = vmul.f32 %v827, %v827
    %v869 = vmin.f32 16.0, %v868
    %v870 = vmul.f32 %v869, 2.1237322e-06
    %v871 = vadd.f32 %v870, 0.00028619796
    %v872 = vmul.f32 %v869, %v871
    %v873 = vadd.f32 %v872, 0.0036580483
    %v874 = vmul.f32 %v869, %v873
    %v875 = vadd.f32 %v874, 0.05243302
    %v876 = vmul.f32 %v869, %v875
    %v877 = vadd.f32 %v876, 0.18741608
    %v878 = vmul.f32 %v869, %v877
    %v879 = vadd.f32 %v878, 1.1283791
    %v880 = vmul.f32 %v827, %v879
    %v881 = vmul.f32 %v869, 3.8918573e-05
    %v882 = vadd.f32 %v881, 0.001143296
    %v883 = vmul.f32 %v869, %v882
    %v884 = vadd.f32 %v883, 0.014752088
    %v885 = vmul.f32 %v869, %v884
    %v886 = vadd.f32 %v885, 0.112945676
    %v887 = vmul.f32 %v869, %v886
    %v888 = vadd.f32 %v887, 0.4994258
    %v889 = vmul.f32 %v869, %v888
    %v890 = vadd.f32 %v889, 1.0
    %v891 = vrcp.pop %v890
    %v892 = vmul.f32 %v890, %v891
    %v893 = vsub.f32 1.0, %v892
    %v894 = vmul.f32 %v891, %v893
    %v895 = vadd.f32 %v891, %v894
    %vm896 = vweird.f32 %v890
    %vm897 = vweird.f32 %v891
    %vm898 = vmor %vm896, %vm897
    %v899 = vsel %vm898, %v891, %v895
    %v900 = vand.u32 2147483647, %v890
    %vm901 = vcmp.eq.f32.partialorder %v900, 8.507059e+37
    %v902 = vand.u32 %v890, 2147483648
    %v903 = vor.u32 1.1754944e-38, %v902
    %v904 = vsel %vm901, %v903, %v899
    %v905 = vmul.f32 %v880, %v904
    %v906 = vmin.f32 %v905, 1.0
    %v907 = vmax.f32 %v906, -1.0
    %v908 = vadd.f32 %v867, 1.0
    %v909 = vadd.f32 %v907, 1.0
    %v910 = vmul.f32 %v824, %v908
    %v911 = vmul.f32 %v825, %v909
    %v913 = vperm.slane %v122, 0
    %915 = vmatpush.msra.mxu0 %v121
    %916 = vmatpush.msra.mxu0 %v120
    %917 = vmatpush.msra.mxu0 %v119
    %918 = vmatpush.msra.mxu0 %v118
    %919 = vmatpush.msra.mxu0 %v117
    %920 = vmatpush.msra.mxu0 %v116
    %921 = vmatpush.msra.mxu0 %v115
    %922 = vmatpush.msra.mxu0 %v114
    %923 = vmatpush.msra.mxu0 %v113
    %924 = vmatpush.msra.mxu0 %v112
    %925 = vmatpush.msra.mxu0 %v111
    %926 = vmatpush.msra.mxu0 %v110
    %927 = vmatpush.msra.mxu0 %v109
    %928 = vmatpush.msra.mxu0 %v108
    %929 = vmatpush.msra.mxu0 %v107
    %930 = vmatpush.msra.mxu0 %v106
    %931 = vmatmul.f32.gmra.mxu0 %v910
    %v932 = vpop.f32.mrf.mxu0
    %v933 = vadd.f32 %v913, %v932
    %934 = vmatmul.f32.gmra.mxu0 %v911
    %v935 = vpop.f32.mrf.mxu0
    %v936 = vadd.f32 %v913, %v935
    %937 = vdwg.mxu0
    %v938 = vadd.f32 %v933, %v790
    %v939 = vadd.f32 %v936, %v791
    %v940 = vsel %vm128, %v938, 0.0
    %941 = vadd.xlane.f32.xlu0 %v940
    %v942 = vpop.xlane.xlu0 %941
    %v943 = vsel %vm128, %v939, 0.0
    %944 = vadd.xlane.f32.xlu0 %v943
    %v945 = vpop.xlane.xlu0 %944
    %v946 = vmul.f32 %v942, %v743
    %v947 = vmul.f32 %v945, %v743
    %v948 = vsub.f32 %v938, %v946
    %v949 = vsub.f32 %v939, %v947
    %v950 = vmul.f32 %v948, %v948
    %v951 = vmul.f32 %v949, %v949
    %v952 = vsel %vm128, %v950, 0.0
    %953 = vadd.xlane.f32.xlu0 %v952
    %v954 = vpop.xlane.xlu0 %953
    %v955 = vsel %vm128, %v951, 0.0
    %956 = vadd.xlane.f32.xlu0 %v955
    %v957 = vpop.xlane.xlu0 %956
    %v958 = vmul.f32 %v954, %v743
    %v959 = vmul.f32 %v957, %v743
    %v960 = vadd.f32 %v958, 1e-05
    %v961 = vadd.f32 %v959, 1e-05
    %v962 = vrsqrt.pop %v960
    %v963 = vmul.f32 %v962, %v960
    %v964 = vmul.f32 %v963, %v962
    %v965 = vmul.f32 0.5, %v964
    %v966 = vsub.f32 1.5, %v965
    %v967 = vmul.f32 %v962, %v966
    %vm968 = vweird.f32 %v960
    %vm969 = vweird.f32 %v962
    %vm970 = vmor %vm968, %vm969
    %v971 = vsel %vm970, %v962, %v967
    %v972 = vrsqrt.pop %v961
    %v973 = vmul.f32 %v972, %v961
    %v974 = vmul.f32 %v973, %v972
    %v975 = vmul.f32 0.5, %v974
    %v976 = vsub.f32 1.5, %v975
    %v977 = vmul.f32 %v972, %v976
    %vm978 = vweird.f32 %v961
    %vm979 = vweird.f32 %v972
    %vm980 = vmor %vm978, %vm979
    %v981 = vsel %vm980, %v972, %v977
    %v982 = vmul.f32 %v948, %v971
    %v983 = vmul.f32 %v949, %v981
    %v985 = vperm.slane %v123, 0
    %v987 = vmul.f32 %v982, %v985
    %v988 = vmul.f32 %v983, %v985
    %v990 = vperm.slane %v124, 0
    %v992 = vadd.f32 %v987, %v990
    %v993 = vadd.f32 %v988, %v990
    %s994 = scalar_lea.vmem %s2, 32
    %v995 = vld [vmem:[%s994] sm:$0xff]
    %v996 = vld [vmem:[%s994 + $0x8] sm:$0xff]
    %v997 = vld [vmem:[%s994 + $0x10] sm:$0xff]
    %v998 = vld [vmem:[%s994 + $0x18] sm:$0xff]
    %s999 = scalar_lea.vmem %s3, 1
    %v1000 = vld [vmem:[%s999] sm:$0x1]
    %s1001 = scalar_lea.vmem %s4, 32
    %v1002 = vld [vmem:[%s1001] sm:$0xff]
    %v1003 = vld [vmem:[%s1001 + $0x8] sm:$0xff]
    %v1004 = vld [vmem:[%s1001 + $0x10] sm:$0xff]
    %v1005 = vld [vmem:[%s1001 + $0x18] sm:$0xff]
    %s1006 = scalar_lea.vmem %s5, 1
    %v1007 = vld [vmem:[%s1006] sm:$0x1]
    %s1008 = scalar_lea.vmem %s6, 32
    %v1009 = vld [vmem:[%s1008] sm:$0xff]
    %v1010 = vld [vmem:[%s1008 + $0x8] sm:$0xff]
    %v1011 = vld [vmem:[%s1008 + $0x10] sm:$0xff]
    %v1012 = vld [vmem:[%s1008 + $0x18] sm:$0xff]
    %s1013 = scalar_lea.vmem %s7, 1
    %v1014 = vld [vmem:[%s1013] sm:$0x1]
    %s1015 = scalar_lea.vmem %s8, 32
    %v1016 = vld [vmem:[%s1015] sm:$0xff]
    %v1017 = vld [vmem:[%s1015 + $0x8] sm:$0xff]
    %v1018 = vld [vmem:[%s1015 + $0x10] sm:$0xff]
    %v1019 = vld [vmem:[%s1015 + $0x18] sm:$0xff]
    %s1020 = scalar_lea.vmem %s9, 1
    %v1021 = vld [vmem:[%s1020] sm:$0x1]
    %s1022 = scalar_lea.vmem %s10, 1
    %v1023 = vld [vmem:[%s1022] sm:$0x1]
    %s1024 = scalar_lea.vmem %s11, 1
    %v1025 = vld [vmem:[%s1024] sm:$0x1]
    %s1026 = scalar_lea.vmem %s12, 32
    %v1027 = vld [vmem:[%s1026] sm:$0xff]
    %v1028 = vld [vmem:[%s1026 + $0x8] sm:$0xff]
    %v1029 = vld [vmem:[%s1026 + $0x10] sm:$0xff]
    %v1030 = vld [vmem:[%s1026 + $0x18] sm:$0xff]
    %s1031 = scalar_lea.vmem %s13, 1
    %v1032 = vld [vmem:[%s1031] sm:$0x1]
    %s1033 = scalar_lea.vmem %s14, 128
    %v1034 = vld [vmem:[%s1033] sm:$0xff]
    %v1035 = vld [vmem:[%s1033 + $0x8] sm:$0xff]
    %v1036 = vld [vmem:[%s1033 + $0x10] sm:$0xff]
    %v1037 = vld [vmem:[%s1033 + $0x18] sm:$0xff]
    %v1038 = vld [vmem:[%s1033 + $0x20] sm:$0xff]
    %v1039 = vld [vmem:[%s1033 + $0x28] sm:$0xff]
    %v1040 = vld [vmem:[%s1033 + $0x30] sm:$0xff]
    %v1041 = vld [vmem:[%s1033 + $0x38] sm:$0xff]
    %v1042 = vld [vmem:[%s1033 + $0x40] sm:$0xff]
    %v1043 = vld [vmem:[%s1033 + $0x48] sm:$0xff]
    %v1044 = vld [vmem:[%s1033 + $0x50] sm:$0xff]
    %v1045 = vld [vmem:[%s1033 + $0x58] sm:$0xff]
    %v1046 = vld [vmem:[%s1033 + $0x60] sm:$0xff]
    %v1047 = vld [vmem:[%s1033 + $0x68] sm:$0xff]
    %v1048 = vld [vmem:[%s1033 + $0x70] sm:$0xff]
    %v1049 = vld [vmem:[%s1033 + $0x78] sm:$0xff]
    %s1050 = scalar_lea.vmem [#allocation2], 1
    %v1051 = vld [vmem:[%s1050] sm:$0x1]
    %s1052 = scalar_lea.vmem %s16, 1
    %v1053 = vld [vmem:[%s1052] sm:$0x1]
    %s1054 = scalar_lea.vmem %s17, 1
    %v1055 = vld [vmem:[%s1054] sm:$0x1]
    %v1057 = vperm.slane %v1000, 0
    %v1060 = vsel %vm128, %v992, 0
    %v1063 = vsel %vm128, %v993, 0
    %1065 = vmatpush.msra.mxu0 0.0
    %1066 = vmatpush.msra.mxu0 0.0
    %1067 = vmatpush.msra.mxu0 0.0
    %1068 = vmatpush.msra.mxu0 0.0
    %1069 = vmatpush.msra.mxu0 0.0
    %1070 = vmatpush.msra.mxu0 0.0
    %1071 = vmatpush.msra.mxu0 0.0
    %1072 = vmatpush.msra.mxu0 0.0
    %1073 = vmatpush.msra.mxu0 0.0
    %1074 = vmatpush.msra.mxu0 0.0
    %1075 = vmatpush.msra.mxu0 0.0
    %1076 = vmatpush.msra.mxu0 0.0
    %1077 = vmatpush.msra.mxu0 %v998
    %1078 = vmatpush.msra.mxu0 %v997
    %1079 = vmatpush.msra.mxu0 %v996
    %1080 = vmatpush.msra.mxu0 %v995
    %1081 = vmatmul.f32.gmra.mxu0 %v1060
    %v1082 = vpop.f32.mrf.mxu0
    %v1083 = vadd.f32 %v1057, %v1082
    %1084 = vmatmul.f32.gmra.mxu0 %v1063
    %v1085 = vpop.f32.mrf.mxu0
    %v1086 = vadd.f32 %v1057, %v1085
    %1087 = vdwg.mxu0
    %v1089 = vperm.slane %v1007, 0
    %1091 = vmatpush.msra.mxu0 0.0
    %1092 = vmatpush.msra.mxu0 0.0
    %1093 = vmatpush.msra.mxu0 0.0
    %1094 = vmatpush.msra.mxu0 0.0
    %1095 = vmatpush.msra.mxu0 0.0
    %1096 = vmatpush.msra.mxu0 0.0
    %1097 = vmatpush.msra.mxu0 0.0
    %1098 = vmatpush.msra.mxu0 0.0
    %1099 = vmatpush.msra.mxu0 0.0
    %1100 = vmatpush.msra.mxu0 0.0
    %1101 = vmatpush.msra.mxu0 0.0
    %1102 = vmatpush.msra.mxu0 0.0
    %1103 = vmatpush.msra.mxu0 %v1005
    %1104 = vmatpush.msra.mxu0 %v1004
    %1105 = vmatpush.msra.mxu0 %v1003
    %1106 = vmatpush.msra.mxu0 %v1002
    %1107 = vmatmul.f32.gmra.mxu0 %v1060
    %v1108 = vpop.f32.mrf.mxu0
    %v1109 = vadd.f32 %v1089, %v1108
    %1110 = vmatmul.f32.gmra.mxu0 %v1063
    %v1111 = vpop.f32.mrf.mxu0
    %v1112 = vadd.f32 %v1089, %v1111
    %1113 = vdwg.mxu0
    %v1115 = vperm.slane %v1014, 0
    %1117 = vmatpush.msra.mxu0 0.0
    %1118 = vmatpush.msra.mxu0 0.0
    %1119 = vmatpush.msra.mxu0 0.0
    %1120 = vmatpush.msra.mxu0 0.0
    %1121 = vmatpush.msra.mxu0 0.0
    %1122 = vmatpush.msra.mxu0 0.0
    %1123 = vmatpush.msra.mxu0 0.0
    %1124 = vmatpush.msra.mxu0 0.0
    %1125 = vmatpush.msra.mxu0 0.0
    %1126 = vmatpush.msra.mxu0 0.0
    %1127 = vmatpush.msra.mxu0 0.0
    %1128 = vmatpush.msra.mxu0 0.0
    %1129 = vmatpush.msra.mxu0 %v1012
    %1130 = vmatpush.msra.mxu0 %v1011
    %1131 = vmatpush.msra.mxu0 %v1010
    %1132 = vmatpush.msra.mxu0 %v1009
    %1133 = vmatmul.f32.gmra.mxu0 %v1060
    %v1134 = vpop.f32.mrf.mxu0
    %v1135 = vadd.f32 %v1115, %v1134
    %1136 = vmatmul.f32.gmra.mxu0 %v1063
    %v1137 = vpop.f32.mrf.mxu0
    %v1138 = vadd.f32 %v1115, %v1137
    %1139 = vdwg.mxu0
    %v1141 = vsel %vm210, %v1083, 0
    %v1144 = vsel %vm210, %v1086, 0
    %v1147 = vsel %vm210, %v1109, 0
    %v1150 = vsel %vm210, %v1112, 0
    %1152 = vmatpush.xpose.msra.mxu0 0.0
    %1153 = vmatpush.xpose.msra.mxu0 0.0
    %1154 = vmatpush.xpose.msra.mxu0 0.0
    %1155 = vmatpush.xpose.msra.mxu0 0.0
    %1156 = vmatpush.xpose.msra.mxu0 0.0
    %1157 = vmatpush.xpose.msra.mxu0 0.0
    %1158 = vmatpush.xpose.msra.mxu0 0.0
    %1159 = vmatpush.xpose.msra.mxu0 0.0
    %1160 = vmatpush.xpose.msra.mxu0 0.0
    %1161 = vmatpush.xpose.msra.mxu0 0.0
    %1162 = vmatpush.xpose.msra.mxu0 0.0
    %1163 = vmatpush.xpose.msra.mxu0 0.0
    %1164 = vmatpush.xpose.msra.mxu0 0.0
    %1165 = vmatpush.xpose.msra.mxu0 0.0
    %1166 = vmatpush.xpose.msra.mxu0 %v1150
    %1167 = vmatpush.xpose.msra.mxu0 %v1147
    %1168 = vmatmul.f32.gmra.mxu0 %v1141
    %v1169 = vpop.f32.mrf.mxu0
    %v1170 = vadd.f32 0.0, %v1169
    %1171 = vmatmul.f32.gmra.mxu0 %v1144
    %v1172 = vpop.f32.mrf.mxu0
    %v1173 = vadd.f32 0.0, %v1172
    %1174 = vdwg.mxu0
    %v1175 = vmul.f32 %v1170, 0.25
    %v1176 = vmul.f32 %v1173, 0.25
    %v1177 = vadd.f32 %v1175, %v77
    %v1178 = vadd.f32 %v1176, %v78
    %v1179 = vsel %vm250, %v1177, -inf
    %1180 = vmax.xlane.f32.xlu0 %v1179
    %v1181 = vpop.xlane.xlu0 %1180
    %v1182 = vsel %vm250, %v1178, -inf
    %1183 = vmax.xlane.f32.xlu0 %v1182
    %v1184 = vpop.xlane.xlu0 %1183
    %v1185 = vsub.f32 %v1177, %v1181
    %v1186 = vsub.f32 %v1178, %v1184
    %v1187 = vmul.f32 %v1185, 1.442695
    %v1188 = vpow.pop %v1187
    %v1189 = vmul.f32 %v1186, 1.442695
    %v1190 = vpow.pop %v1189
    %v1191 = vsel %vm250, %v1188, 0.0
    %1192 = vadd.xlane.f32.xlu0 %v1191
    %v1193 = vpop.xlane.xlu0 %1192
    %v1194 = vsel %vm250, %v1190, 0.0
    %1195 = vadd.xlane.f32.xlu0 %v1194
    %v1196 = vpop.xlane.xlu0 %1195
    %v1197 = vrcp.pop %v1193
    %v1198 = vrcp.pop %v1196
    %v1199 = vmul.f32 %v1188, %v1197
    %v1200 = vmul.f32 %v1190, %v1198
    %v1202 = vsel %vm250, %v1199, 0
    %v1205 = vsel %vm250, %v1200, 0
    %1207 = vmatpush.msra.mxu0 0.0
    %1208 = vmatpush.msra.mxu0 0.0
    %1209 = vmatpush.msra.mxu0 0.0
    %1210 = vmatpush.msra.mxu0 0.0
    %1211 = vmatpush.msra.mxu0 0.0
    %1212 = vmatpush.msra.mxu0 0.0
    %1213 = vmatpush.msra.mxu0 0.0
    %1214 = vmatpush.msra.mxu0 0.0
    %1215 = vmatpush.msra.mxu0 0.0
    %1216 = vmatpush.msra.mxu0 0.0
    %1217 = vmatpush.msra.mxu0 0.0
    %1218 = vmatpush.msra.mxu0 0.0
    %1219 = vmatpush.msra.mxu0 0.0
    %1220 = vmatpush.msra.mxu0 0.0
    %1221 = vmatpush.msra.mxu0 %v1138
    %1222 = vmatpush.msra.mxu0 %v1135
    %1223 = vmatmul.f32.gmra.mxu0 %v1202
    %v1224 = vpop.f32.mrf.mxu0
    %v1225 = vadd.f32 0.0, %v1224
    %1226 = vmatmul.f32.gmra.mxu0 %v1205
    %v1227 = vpop.f32.mrf.mxu0
    %v1228 = vadd.f32 0.0, %v1227
    %1229 = vdwg.mxu0
    %1230 = vrot.lane.b32.xlu0 %v1083, 120
    %v1231 = vpop.permute.xlu0 %1230
    %1232 = vrot.lane.b32.xlu0 %v1086, 120
    %v1233 = vpop.permute.xlu0 %1232
    %1234 = vrot.lane.b32.xlu0 %v1109, 120
    %v1235 = vpop.permute.xlu0 %1234
    %1236 = vrot.lane.b32.xlu0 %v1112, 120
    %v1237 = vpop.permute.xlu0 %1236
    %v1238 = vsel %vm210, %v1231, 0
    %v1240 = vsel %vm210, %v1233, 0
    %v1242 = vsel %vm210, %v1235, 0
    %v1244 = vsel %vm210, %v1237, 0
    %1246 = vmatpush.xpose.msra.mxu0 0.0
    %1247 = vmatpush.xpose.msra.mxu0 0.0
    %1248 = vmatpush.xpose.msra.mxu0 0.0
    %1249 = vmatpush.xpose.msra.mxu0 0.0
    %1250 = vmatpush.xpose.msra.mxu0 0.0
    %1251 = vmatpush.xpose.msra.mxu0 0.0
    %1252 = vmatpush.xpose.msra.mxu0 0.0
    %1253 = vmatpush.xpose.msra.mxu0 0.0
    %1254 = vmatpush.xpose.msra.mxu0 0.0
    %1255 = vmatpush.xpose.msra.mxu0 0.0
    %1256 = vmatpush.xpose.msra.mxu0 0.0
    %1257 = vmatpush.xpose.msra.mxu0 0.0
    %1258 = vmatpush.xpose.msra.mxu0 0.0
    %1259 = vmatpush.xpose.msra.mxu0 0.0
    %1260 = vmatpush.xpose.msra.mxu0 %v1244
    %1261 = vmatpush.xpose.msra.mxu0 %v1242
    %1262 = vmatmul.f32.gmra.mxu0 %v1238
    %v1263 = vpop.f32.mrf.mxu0
    %v1264 = vadd.f32 0.0, %v1263
    %1265 = vmatmul.f32.gmra.mxu0 %v1240
    %v1266 = vpop.f32.mrf.mxu0
    %v1267 = vadd.f32 0.0, %v1266
    %1268 = vdwg.mxu0
    %v1269 = vmul.f32 %v1264, 0.25
    %v1270 = vmul.f32 %v1267, 0.25
    %v1271 = vadd.f32 %v1269, %v77
    %v1272 = vadd.f32 %v1270, %v78
    %v1273 = vsel %vm250, %v1271, -inf
    %1274 = vmax.xlane.f32.xlu0 %v1273
    %v1275 = vpop.xlane.xlu0 %1274
    %v1276 = vsel %vm250, %v1272, -inf
    %1277 = vmax.xlane.f32.xlu0 %v1276
    %v1278 = vpop.xlane.xlu0 %1277
    %v1279 = vsub.f32 %v1271, %v1275
    %v1280 = vsub.f32 %v1272, %v1278
    %v1281 = vmul.f32 %v1279, 1.442695
    %v1282 = vpow.pop %v1281
    %v1283 = vmul.f32 %v1280, 1.442695
    %v1284 = vpow.pop %v1283
    %v1285 = vsel %vm250, %v1282, 0.0
    %1286 = vadd.xlane.f32.xlu0 %v1285
    %v1287 = vpop.xlane.xlu0 %1286
    %v1288 = vsel %vm250, %v1284, 0.0
    %1289 = vadd.xlane.f32.xlu0 %v1288
    %v1290 = vpop.xlane.xlu0 %1289
    %v1291 = vrcp.pop %v1287
    %v1292 = vrcp.pop %v1290
    %v1293 = vmul.f32 %v1282, %v1291
    %v1294 = vmul.f32 %v1284, %v1292
    %1297 = vrot.lane.b32.xlu0 %v1135, 120
    %v1298 = vpop.permute.xlu0 %1297
    %1299 = vrot.lane.b32.xlu0 %v1138, 120
    %v1300 = vpop.permute.xlu0 %1299
    %v1304 = vsel %vm250, %v1293, 0
    %v1307 = vsel %vm250, %v1294, 0
    %1309 = vmatpush.msra.mxu0 0.0
    %1310 = vmatpush.msra.mxu0 0.0
    %1311 = vmatpush.msra.mxu0 0.0
    %1312 = vmatpush.msra.mxu0 0.0
    %1313 = vmatpush.msra.mxu0 0.0
    %1314 = vmatpush.msra.mxu0 0.0
    %1315 = vmatpush.msra.mxu0 0.0
    %1316 = vmatpush.msra.mxu0 0.0
    %1317 = vmatpush.msra.mxu0 0.0
    %1318 = vmatpush.msra.mxu0 0.0
    %1319 = vmatpush.msra.mxu0 0.0
    %1320 = vmatpush.msra.mxu0 0.0
    %1321 = vmatpush.msra.mxu0 0.0
    %1322 = vmatpush.msra.mxu0 0.0
    %1323 = vmatpush.msra.mxu0 %v1300
    %1324 = vmatpush.msra.mxu0 %v1298
    %1325 = vmatmul.f32.gmra.mxu0 %v1304
    %v1326 = vpop.f32.mrf.mxu0
    %v1327 = vadd.f32 0.0, %v1326
    %1328 = vmatmul.f32.gmra.mxu0 %v1307
    %v1329 = vpop.f32.mrf.mxu0
    %v1330 = vadd.f32 0.0, %v1329
    %1331 = vdwg.mxu0
    %v1333 = vsel %vm210, %v1327, 0
    %v1336 = vsel %vm210, %v1330, 0
    %1338 = vmatpush.msra.mxu0 0.0
    %1339 = vmatpush.msra.mxu0 0.0
    %1340 = vmatpush.msra.mxu0 0.0
    %1341 = vmatpush.msra.mxu0 0.0
    %1342 = vmatpush.msra.mxu0 0.0
    %1343 = vmatpush.msra.mxu0 0.0
    %1344 = vmatpush.msra.mxu0 0.0
    %1345 = vmatpush.msra.mxu0 0.0
    %1346 = vmatpush.msra.mxu0 0.0
    %1347 = vmatpush.msra.mxu0 0.0
    %1348 = vmatpush.msra.mxu0 0.0
    %1349 = vmatpush.msra.mxu0 0.0
    %1350 = vmatpush.msra.mxu0 0.0
    %1351 = vmatpush.msra.mxu0 0.0
    %1352 = vmatpush.msra.mxu0 0.0
    %1353 = vmatpush.msra.mxu0 %v1017
    %1354 = vmatmul.f32.gmra.mxu0 %v1333
    %v1355 = vpop.f32.mrf.mxu0
    %v1356 = vadd.f32 0.0, %v1355
    %1357 = vmatmul.f32.gmra.mxu0 %v1336
    %v1358 = vpop.f32.mrf.mxu0
    %v1359 = vadd.f32 0.0, %v1358
    %1360 = vdwg.mxu0
    %v1362 = vsel %vm210, %v1225, 0
    %v1365 = vsel %vm210, %v1228, 0
    %1367 = vmatpush.msra.mxu0 0.0
    %1368 = vmatpush.msra.mxu0 0.0
    %1369 = vmatpush.msra.mxu0 0.0
    %1370 = vmatpush.msra.mxu0 0.0
    %1371 = vmatpush.msra.mxu0 0.0
    %1372 = vmatpush.msra.mxu0 0.0
    %1373 = vmatpush.msra.mxu0 0.0
    %1374 = vmatpush.msra.mxu0 0.0
    %1375 = vmatpush.msra.mxu0 0.0
    %1376 = vmatpush.msra.mxu0 0.0
    %1377 = vmatpush.msra.mxu0 0.0
    %1378 = vmatpush.msra.mxu0 0.0
    %1379 = vmatpush.msra.mxu0 0.0
    %1380 = vmatpush.msra.mxu0 0.0
    %1381 = vmatpush.msra.mxu0 0.0
    %1382 = vmatpush.msra.mxu0 %v1016
    %1383 = vmatmul.f32.gmra.mxu0 %v1362
    %v1384 = vpop.f32.mrf.mxu0
    %v1385 = vadd.f32 %v1356, %v1384
    %1386 = vmatmul.f32.gmra.mxu0 %v1365
    %v1387 = vpop.f32.mrf.mxu0
    %v1388 = vadd.f32 %v1359, %v1387
    %1389 = vdwg.mxu0
    %1390 = vrot.lane.b32.xlu0 %v1083, 112
    %v1391 = vpop.permute.xlu0 %1390
    %1392 = vrot.lane.b32.xlu0 %v1086, 112
    %v1393 = vpop.permute.xlu0 %1392
    %1394 = vrot.lane.b32.xlu0 %v1109, 112
    %v1395 = vpop.permute.xlu0 %1394
    %1396 = vrot.lane.b32.xlu0 %v1112, 112
    %v1397 = vpop.permute.xlu0 %1396
    %v1398 = vsel %vm210, %v1391, 0
    %v1400 = vsel %vm210, %v1393, 0
    %v1402 = vsel %vm210, %v1395, 0
    %v1404 = vsel %vm210, %v1397, 0
    %1406 = vmatpush.xpose.msra.mxu0 0.0
    %1407 = vmatpush.xpose.msra.mxu0 0.0
    %1408 = vmatpush.xpose.msra.mxu0 0.0
    %1409 = vmatpush.xpose.msra.mxu0 0.0
    %1410 = vmatpush.xpose.msra.mxu0 0.0
    %1411 = vmatpush.xpose.msra.mxu0 0.0
    %1412 = vmatpush.xpose.msra.mxu0 0.0
    %1413 = vmatpush.xpose.msra.mxu0 0.0
    %1414 = vmatpush.xpose.msra.mxu0 0.0
    %1415 = vmatpush.xpose.msra.mxu0 0.0
    %1416 = vmatpush.xpose.msra.mxu0 0.0
    %1417 = vmatpush.xpose.msra.mxu0 0.0
    %1418 = vmatpush.xpose.msra.mxu0 0.0
    %1419 = vmatpush.xpose.msra.mxu0 0.0
    %1420 = vmatpush.xpose.msra.mxu0 %v1404
    %1421 = vmatpush.xpose.msra.mxu0 %v1402
    %1422 = vmatmul.f32.gmra.mxu0 %v1398
    %v1423 = vpop.f32.mrf.mxu0
    %v1424 = vadd.f32 0.0, %v1423
    %1425 = vmatmul.f32.gmra.mxu0 %v1400
    %v1426 = vpop.f32.mrf.mxu0
    %v1427 = vadd.f32 0.0, %v1426
    %1428 = vdwg.mxu0
    %v1429 = vmul.f32 %v1424, 0.25
    %v1430 = vmul.f32 %v1427, 0.25
    %v1431 = vadd.f32 %v1429, %v77
    %v1432 = vadd.f32 %v1430, %v78
    %v1433 = vsel %vm250, %v1431, -inf
    %1434 = vmax.xlane.f32.xlu0 %v1433
    %v1435 = vpop.xlane.xlu0 %1434
    %v1436 = vsel %vm250, %v1432, -inf
    %1437 = vmax.xlane.f32.xlu0 %v1436
    %v1438 = vpop.xlane.xlu0 %1437
    %v1439 = vsub.f32 %v1431, %v1435
    %v1440 = vsub.f32 %v1432, %v1438
    %v1441 = vmul.f32 %v1439, 1.442695
    %v1442 = vpow.pop %v1441
    %v1443 = vmul.f32 %v1440, 1.442695
    %v1444 = vpow.pop %v1443
    %v1445 = vsel %vm250, %v1442, 0.0
    %1446 = vadd.xlane.f32.xlu0 %v1445
    %v1447 = vpop.xlane.xlu0 %1446
    %v1448 = vsel %vm250, %v1444, 0.0
    %1449 = vadd.xlane.f32.xlu0 %v1448
    %v1450 = vpop.xlane.xlu0 %1449
    %v1451 = vrcp.pop %v1447
    %v1452 = vrcp.pop %v1450
    %v1453 = vmul.f32 %v1442, %v1451
    %v1454 = vmul.f32 %v1444, %v1452
    %1455 = vrot.lane.b32.xlu0 %v1135, 112
    %v1456 = vpop.permute.xlu0 %1455
    %1457 = vrot.lane.b32.xlu0 %v1138, 112
    %v1458 = vpop.permute.xlu0 %1457
    %v1462 = vsel %vm250, %v1453, 0
    %v1465 = vsel %vm250, %v1454, 0
    %1467 = vmatpush.msra.mxu0 0.0
    %1468 = vmatpush.msra.mxu0 0.0
    %1469 = vmatpush.msra.mxu0 0.0
    %1470 = vmatpush.msra.mxu0 0.0
    %1471 = vmatpush.msra.mxu0 0.0
    %1472 = vmatpush.msra.mxu0 0.0
    %1473 = vmatpush.msra.mxu0 0.0
    %1474 = vmatpush.msra.mxu0 0.0
    %1475 = vmatpush.msra.mxu0 0.0
    %1476 = vmatpush.msra.mxu0 0.0
    %1477 = vmatpush.msra.mxu0 0.0
    %1478 = vmatpush.msra.mxu0 0.0
    %1479 = vmatpush.msra.mxu0 0.0
    %1480 = vmatpush.msra.mxu0 0.0
    %1481 = vmatpush.msra.mxu0 %v1458
    %1482 = vmatpush.msra.mxu0 %v1456
    %1483 = vmatmul.f32.gmra.mxu0 %v1462
    %v1484 = vpop.f32.mrf.mxu0
    %v1485 = vadd.f32 0.0, %v1484
    %1486 = vmatmul.f32.gmra.mxu0 %v1465
    %v1487 = vpop.f32.mrf.mxu0
    %v1488 = vadd.f32 0.0, %v1487
    %1489 = vdwg.mxu0
    %v1491 = vsel %vm210, %v1485, 0
    %v1494 = vsel %vm210, %v1488, 0
    %1496 = vmatpush.msra.mxu0 0.0
    %1497 = vmatpush.msra.mxu0 0.0
    %1498 = vmatpush.msra.mxu0 0.0
    %1499 = vmatpush.msra.mxu0 0.0
    %1500 = vmatpush.msra.mxu0 0.0
    %1501 = vmatpush.msra.mxu0 0.0
    %1502 = vmatpush.msra.mxu0 0.0
    %1503 = vmatpush.msra.mxu0 0.0
    %1504 = vmatpush.msra.mxu0 0.0
    %1505 = vmatpush.msra.mxu0 0.0
    %1506 = vmatpush.msra.mxu0 0.0
    %1507 = vmatpush.msra.mxu0 0.0
    %1508 = vmatpush.msra.mxu0 0.0
    %1509 = vmatpush.msra.mxu0 0.0
    %1510 = vmatpush.msra.mxu0 0.0
    %1511 = vmatpush.msra.mxu0 %v1018
    %1512 = vmatmul.f32.gmra.mxu0 %v1491
    %v1513 = vpop.f32.mrf.mxu0
    %v1514 = vadd.f32 0.0, %v1513
    %1515 = vmatmul.f32.gmra.mxu0 %v1494
    %v1516 = vpop.f32.mrf.mxu0
    %v1517 = vadd.f32 0.0, %v1516
    %1518 = vdwg.mxu0
    %v1519 = vadd.f32 %v1385, %v1514
    %v1520 = vadd.f32 %v1388, %v1517
    %1521 = vrot.lane.b32.xlu0 %v1083, 104
    %v1522 = vpop.permute.xlu0 %1521
    %1523 = vrot.lane.b32.xlu0 %v1086, 104
    %v1524 = vpop.permute.xlu0 %1523
    %1525 = vrot.lane.b32.xlu0 %v1109, 104
    %v1526 = vpop.permute.xlu0 %1525
    %1527 = vrot.lane.b32.xlu0 %v1112, 104
    %v1528 = vpop.permute.xlu0 %1527
    %v1529 = vsel %vm210, %v1522, 0
    %v1531 = vsel %vm210, %v1524, 0
    %v1533 = vsel %vm210, %v1526, 0
    %v1535 = vsel %vm210, %v1528, 0
    %1537 = vmatpush.xpose.msra.mxu0 0.0
    %1538 = vmatpush.xpose.msra.mxu0 0.0
    %1539 = vmatpush.xpose.msra.mxu0 0.0
    %1540 = vmatpush.xpose.msra.mxu0 0.0
    %1541 = vmatpush.xpose.msra.mxu0 0.0
    %1542 = vmatpush.xpose.msra.mxu0 0.0
    %1543 = vmatpush.xpose.msra.mxu0 0.0
    %1544 = vmatpush.xpose.msra.mxu0 0.0
    %1545 = vmatpush.xpose.msra.mxu0 0.0
    %1546 = vmatpush.xpose.msra.mxu0 0.0
    %1547 = vmatpush.xpose.msra.mxu0 0.0
    %1548 = vmatpush.xpose.msra.mxu0 0.0
    %1549 = vmatpush.xpose.msra.mxu0 0.0
    %1550 = vmatpush.xpose.msra.mxu0 0.0
    %1551 = vmatpush.xpose.msra.mxu0 %v1535
    %1552 = vmatpush.xpose.msra.mxu0 %v1533
    %1553 = vmatmul.f32.gmra.mxu0 %v1529
    %v1554 = vpop.f32.mrf.mxu0
    %v1555 = vadd.f32 0.0, %v1554
    %1556 = vmatmul.f32.gmra.mxu0 %v1531
    %v1557 = vpop.f32.mrf.mxu0
    %v1558 = vadd.f32 0.0, %v1557
    %1559 = vdwg.mxu0
    %v1560 = vmul.f32 %v1555, 0.25
    %v1561 = vmul.f32 %v1558, 0.25
    %v1562 = vadd.f32 %v1560, %v77
    %v1563 = vadd.f32 %v1561, %v78
    %v1564 = vsel %vm250, %v1562, -inf
    %1565 = vmax.xlane.f32.xlu0 %v1564
    %v1566 = vpop.xlane.xlu0 %1565
    %v1567 = vsel %vm250, %v1563, -inf
    %1568 = vmax.xlane.f32.xlu0 %v1567
    %v1569 = vpop.xlane.xlu0 %1568
    %v1570 = vsub.f32 %v1562, %v1566
    %v1571 = vsub.f32 %v1563, %v1569
    %v1572 = vmul.f32 %v1570, 1.442695
    %v1573 = vpow.pop %v1572
    %v1574 = vmul.f32 %v1571, 1.442695
    %v1575 = vpow.pop %v1574
    %v1576 = vsel %vm250, %v1573, 0.0
    %1577 = vadd.xlane.f32.xlu0 %v1576
    %v1578 = vpop.xlane.xlu0 %1577
    %v1579 = vsel %vm250, %v1575, 0.0
    %1580 = vadd.xlane.f32.xlu0 %v1579
    %v1581 = vpop.xlane.xlu0 %1580
    %v1582 = vrcp.pop %v1578
    %v1583 = vrcp.pop %v1581
    %v1584 = vmul.f32 %v1573, %v1582
    %v1585 = vmul.f32 %v1575, %v1583
    %1586 = vrot.lane.b32.xlu0 %v1135, 104
    %v1587 = vpop.permute.xlu0 %1586
    %1588 = vrot.lane.b32.xlu0 %v1138, 104
    %v1589 = vpop.permute.xlu0 %1588
    %v1593 = vsel %vm250, %v1584, 0
    %v1596 = vsel %vm250, %v1585, 0
    %1598 = vmatpush.msra.mxu0 0.0
    %1599 = vmatpush.msra.mxu0 0.0
    %1600 = vmatpush.msra.mxu0 0.0
    %1601 = vmatpush.msra.mxu0 0.0
    %1602 = vmatpush.msra.mxu0 0.0
    %1603 = vmatpush.msra.mxu0 0.0
    %1604 = vmatpush.msra.mxu0 0.0
    %1605 = vmatpush.msra.mxu0 0.0
    %1606 = vmatpush.msra.mxu0 0.0
    %1607 = vmatpush.msra.mxu0 0.0
    %1608 = vmatpush.msra.mxu0 0.0
    %1609 = vmatpush.msra.mxu0 0.0
    %1610 = vmatpush.msra.mxu0 0.0
    %1611 = vmatpush.msra.mxu0 0.0
    %1612 = vmatpush.msra.mxu0 %v1589
    %1613 = vmatpush.msra.mxu0 %v1587
    %1614 = vmatmul.f32.gmra.mxu0 %v1593
    %v1615 = vpop.f32.mrf.mxu0
    %v1616 = vadd.f32 0.0, %v1615
    %1617 = vmatmul.f32.gmra.mxu0 %v1596
    %v1618 = vpop.f32.mrf.mxu0
    %v1619 = vadd.f32 0.0, %v1618
    %1620 = vdwg.mxu0
    %v1622 = vsel %vm210, %v1616, 0
    %v1625 = vsel %vm210, %v1619, 0
    %1627 = vmatpush.msra.mxu0 0.0
    %1628 = vmatpush.msra.mxu0 0.0
    %1629 = vmatpush.msra.mxu0 0.0
    %1630 = vmatpush.msra.mxu0 0.0
    %1631 = vmatpush.msra.mxu0 0.0
    %1632 = vmatpush.msra.mxu0 0.0
    %1633 = vmatpush.msra.mxu0 0.0
    %1634 = vmatpush.msra.mxu0 0.0
    %1635 = vmatpush.msra.mxu0 0.0
    %1636 = vmatpush.msra.mxu0 0.0
    %1637 = vmatpush.msra.mxu0 0.0
    %1638 = vmatpush.msra.mxu0 0.0
    %1639 = vmatpush.msra.mxu0 0.0
    %1640 = vmatpush.msra.mxu0 0.0
    %1641 = vmatpush.msra.mxu0 0.0
    %1642 = vmatpush.msra.mxu0 %v1019
    %1643 = vmatmul.f32.gmra.mxu0 %v1622
    %v1644 = vpop.f32.mrf.mxu0
    %v1645 = vadd.f32 0.0, %v1644
    %1646 = vmatmul.f32.gmra.mxu0 %v1625
    %v1647 = vpop.f32.mrf.mxu0
    %v1648 = vadd.f32 0.0, %v1647
    %1649 = vdwg.mxu0
    %v1650 = vadd.f32 %v1519, %v1645
    %v1651 = vadd.f32 %v1520, %v1648
    %v1653 = vperm.slane %v1021, 0
    %v1655 = vadd.f32 %v1650, %v1653
    %v1656 = vadd.f32 %v1651, %v1653
    %v1657 = vadd.f32 %v1655, %v992
    %v1658 = vadd.f32 %v1656, %v993
    %v1659 = vsel %vm128, %v1657, 0.0
    %1660 = vadd.xlane.f32.xlu0 %v1659
    %v1661 = vpop.xlane.xlu0 %1660
    %v1662 = vsel %vm128, %v1658, 0.0
    %1663 = vadd.xlane.f32.xlu0 %v1662
    %v1664 = vpop.xlane.xlu0 %1663
    %v1665 = vmul.f32 %v1661, %v743
    %v1666 = vmul.f32 %v1664, %v743
    %v1667 = vsub.f32 %v1657, %v1665
    %v1668 = vsub.f32 %v1658, %v1666
    %v1669 = vmul.f32 %v1667, %v1667
    %v1670 = vmul.f32 %v1668, %v1668
    %v1671 = vsel %vm128, %v1669, 0.0
    %1672 = vadd.xlane.f32.xlu0 %v1671
    %v1673 = vpop.xlane.xlu0 %1672
    %v1674 = vsel %vm128, %v1670, 0.0
    %1675 = vadd.xlane.f32.xlu0 %v1674
    %v1676 = vpop.xlane.xlu0 %1675
    %v1677 = vmul.f32 %v1673, %v743
    %v1678 = vmul.f32 %v1676, %v743
    %v1679 = vadd.f32 %v1677, 1e-05
    %v1680 = vadd.f32 %v1678, 1e-05
    %v1681 = vrsqrt.pop %v1679
    %v1682 = vmul.f32 %v1681, %v1679
    %v1683 = vmul.f32 %v1682, %v1681
    %v1684 = vmul.f32 0.5, %v1683
    %v1685 = vsub.f32 1.5, %v1684
    %v1686 = vmul.f32 %v1681, %v1685
    %vm1687 = vweird.f32 %v1679
    %vm1688 = vweird.f32 %v1681
    %vm1689 = vmor %vm1687, %vm1688
    %v1690 = vsel %vm1689, %v1681, %v1686
    %v1691 = vrsqrt.pop %v1680
    %v1692 = vmul.f32 %v1691, %v1680
    %v1693 = vmul.f32 %v1692, %v1691
    %v1694 = vmul.f32 0.5, %v1693
    %v1695 = vsub.f32 1.5, %v1694
    %v1696 = vmul.f32 %v1691, %v1695
    %vm1697 = vweird.f32 %v1680
    %vm1698 = vweird.f32 %v1691
    %vm1699 = vmor %vm1697, %vm1698
    %v1700 = vsel %vm1699, %v1691, %v1696
    %v1701 = vmul.f32 %v1667, %v1690
    %v1702 = vmul.f32 %v1668, %v1700
    %v1704 = vperm.slane %v1023, 0
    %v1706 = vmul.f32 %v1701, %v1704
    %v1707 = vmul.f32 %v1702, %v1704
    %v1709 = vperm.slane %v1025, 0
    %v1711 = vadd.f32 %v1706, %v1709
    %v1712 = vadd.f32 %v1707, %v1709
    %v1714 = vperm.slane %v1032, 0
    %v1717 = vsel %vm128, %v1711, 0
    %v1720 = vsel %vm128, %v1712, 0
    %1722 = vmatpush.msra.mxu0 0.0
    %1723 = vmatpush.msra.mxu0 0.0
    %1724 = vmatpush.msra.mxu0 0.0
    %1725 = vmatpush.msra.mxu0 0.0
    %1726 = vmatpush.msra.mxu0 0.0
    %1727 = vmatpush.msra.mxu0 0.0
    %1728 = vmatpush.msra.mxu0 0.0
    %1729 = vmatpush.msra.mxu0 0.0
    %1730 = vmatpush.msra.mxu0 0.0
    %1731 = vmatpush.msra.mxu0 0.0
    %1732 = vmatpush.msra.mxu0 0.0
    %1733 = vmatpush.msra.mxu0 0.0
    %1734 = vmatpush.msra.mxu0 %v1030
    %1735 = vmatpush.msra.mxu0 %v1029
    %1736 = vmatpush.msra.mxu0 %v1028
    %1737 = vmatpush.msra.mxu0 %v1027
    %1738 = vmatmul.f32.gmra.mxu0 %v1717
    %v1739 = vpop.f32.mrf.mxu0
    %v1740 = vadd.f32 %v1714, %v1739
    %1741 = vmatmul.f32.gmra.mxu0 %v1720
    %v1742 = vpop.f32.mrf.mxu0
    %v1743 = vadd.f32 %v1714, %v1742
    %1744 = vdwg.mxu0
    %v1745 = vmul.f32 %v1740, 0.5
    %v1746 = vmul.f32 %v1743, 0.5
    %v1747 = vmul.f32 %v1740, 0.70710677
    %v1748 = vmul.f32 %v1743, 0.70710677
    %v1749 = vmul.f32 %v1747, %v1747
    %v1750 = vmin.f32 16.0, %v1749
    %v1751 = vmul.f32 %v1750, 2.1237322e-06
    %v1752 = vadd.f32 %v1751, 0.00028619796
    %v1753 = vmul.f32 %v1750, %v1752
    %v1754 = vadd.f32 %v1753, 0.0036580483
    %v1755 = vmul.f32 %v1750, %v1754
    %v1756 = vadd.f32 %v1755, 0.05243302
    %v1757 = vmul.f32 %v1750, %v1756
    %v1758 = vadd.f32 %v1757, 0.18741608
    %v1759 = vmul.f32 %v1750, %v1758
    %v1760 = vadd.f32 %v1759, 1.1283791
    %v1761 = vmul.f32 %v1747, %v1760
    %v1762 = vmul.f32 %v1750, 3.8918573e-05
    %v1763 = vadd.f32 %v1762, 0.001143296
    %v1764 = vmul.f32 %v1750, %v1763
    %v1765 = vadd.f32 %v1764, 0.014752088
    %v1766 = vmul.f32 %v1750, %v1765
    %v1767 = vadd.f32 %v1766, 0.112945676
    %v1768 = vmul.f32 %v1750, %v1767
    %v1769 = vadd.f32 %v1768, 0.4994258
    %v1770 = vmul.f32 %v1750, %v1769
    %v1771 = vadd.f32 %v1770, 1.0
    %v1772 = vrcp.pop %v1771
    %v1773 = vmul.f32 %v1771, %v1772
    %v1774 = vsub.f32 1.0, %v1773
    %v1775 = vmul.f32 %v1772, %v1774
    %v1776 = vadd.f32 %v1772, %v1775
    %vm1777 = vweird.f32 %v1771
    %vm1778 = vweird.f32 %v1772
    %vm1779 = vmor %vm1777, %vm1778
    %v1780 = vsel %vm1779, %v1772, %v1776
    %v1781 = vand.u32 2147483647, %v1771
    %vm1782 = vcmp.eq.f32.partialorder %v1781, 8.507059e+37
    %v1783 = vand.u32 %v1771, 2147483648
    %v1784 = vor.u32 1.1754944e-38, %v1783
    %v1785 = vsel %vm1782, %v1784, %v1780
    %v1786 = vmul.f32 %v1761, %v1785
    %v1787 = vmin.f32 %v1786, 1.0
    %v1788 = vmax.f32 %v1787, -1.0
    %v1789 = vmul.f32 %v1748, %v1748
    %v1790 = vmin.f32 16.0, %v1789
    %v1791 = vmul.f32 %v1790, 2.1237322e-06
    %v1792 = vadd.f32 %v1791, 0.00028619796
    %v1793 = vmul.f32 %v1790, %v1792
    %v1794 = vadd.f32 %v1793, 0.0036580483
    %v1795 = vmul.f32 %v1790, %v1794
    %v1796 = vadd.f32 %v1795, 0.05243302
    %v1797 = vmul.f32 %v1790, %v1796
    %v1798 = vadd.f32 %v1797, 0.18741608
    %v1799 = vmul.f32 %v1790, %v1798
    %v1800 = vadd.f32 %v1799, 1.1283791
    %v1801 = vmul.f32 %v1748, %v1800
    %v1802 = vmul.f32 %v1790, 3.8918573e-05
    %v1803 = vadd.f32 %v1802, 0.001143296
    %v1804 = vmul.f32 %v1790, %v1803
    %v1805 = vadd.f32 %v1804, 0.014752088
    %v1806 = vmul.f32 %v1790, %v1805
    %v1807 = vadd.f32 %v1806, 0.112945676
    %v1808 = vmul.f32 %v1790, %v1807
    %v1809 = vadd.f32 %v1808, 0.4994258
    %v1810 = vmul.f32 %v1790, %v1809
    %v1811 = vadd.f32 %v1810, 1.0
    %v1812 = vrcp.pop %v1811
    %v1813 = vmul.f32 %v1811, %v1812
    %v1814 = vsub.f32 1.0, %v1813
    %v1815 = vmul.f32 %v1812, %v1814
    %v1816 = vadd.f32 %v1812, %v1815
    %vm1817 = vweird.f32 %v1811
    %vm1818 = vweird.f32 %v1812
    %vm1819 = vmor %vm1817, %vm1818
    %v1820 = vsel %vm1819, %v1812, %v1816
    %v1821 = vand.u32 2147483647, %v1811
    %vm1822 = vcmp.eq.f32.partialorder %v1821, 8.507059e+37
    %v1823 = vand.u32 %v1811, 2147483648
    %v1824 = vor.u32 1.1754944e-38, %v1823
    %v1825 = vsel %vm1822, %v1824, %v1820
    %v1826 = vmul.f32 %v1801, %v1825
    %v1827 = vmin.f32 %v1826, 1.0
    %v1828 = vmax.f32 %v1827, -1.0
    %v1829 = vadd.f32 %v1788, 1.0
    %v1830 = vadd.f32 %v1828, 1.0
    %v1831 = vmul.f32 %v1745, %v1829
    %v1832 = vmul.f32 %v1746, %v1830
    %v1834 = vperm.slane %v1051, 0
    %1836 = vmatpush.msra.mxu0 %v1049
    %1837 = vmatpush.msra.mxu0 %v1048
    %1838 = vmatpush.msra.mxu0 %v1047
    %1839 = vmatpush.msra.mxu0 %v1046
    %1840 = vmatpush.msra.mxu0 %v1045
    %1841 = vmatpush.msra.mxu0 %v1044
    %1842 = vmatpush.msra.mxu0 %v1043
    %1843 = vmatpush.msra.mxu0 %v1042
    %1844 = vmatpush.msra.mxu0 %v1041
    %1845 = vmatpush.msra.mxu0 %v1040
    %1846 = vmatpush.msra.mxu0 %v1039
    %1847 = vmatpush.msra.mxu0 %v1038
    %1848 = vmatpush.msra.mxu0 %v1037
    %1849 = vmatpush.msra.mxu0 %v1036
    %1850 = vmatpush.msra.mxu0 %v1035
    %1851 = vmatpush.msra.mxu0 %v1034
    %1852 = vmatmul.f32.gmra.mxu0 %v1831
    %v1853 = vpop.f32.mrf.mxu0
    %v1854 = vadd.f32 %v1834, %v1853
    %1855 = vmatmul.f32.gmra.mxu0 %v1832
    %v1856 = vpop.f32.mrf.mxu0
    %v1857 = vadd.f32 %v1834, %v1856
    %1858 = vdwg.mxu0
    %v1859 = vadd.f32 %v1854, %v1711
    %v1860 = vadd.f32 %v1857, %v1712
    %v1861 = vsel %vm128, %v1859, 0.0
    %1862 = vadd.xlane.f32.xlu0 %v1861
    %v1863 = vpop.xlane.xlu0 %1862
    %v1864 = vsel %vm128, %v1860, 0.0
    %1865 = vadd.xlane.f32.xlu0 %v1864
    %v1866 = vpop.xlane.xlu0 %1865
    %v1867 = vmul.f32 %v1863, %v743
    %v1868 = vmul.f32 %v1866, %v743
    %v1869 = vsub.f32 %v1859, %v1867
    %v1870 = vsub.f32 %v1860, %v1868
    %v1871 = vmul.f32 %v1869, %v1869
    %v1872 = vmul.f32 %v1870, %v1870
    %v1873 = vsel %vm128, %v1871, 0.0
    %1874 = vadd.xlane.f32.xlu0 %v1873
    %v1875 = vpop.xlane.xlu0 %1874
    %v1876 = vsel %vm128, %v1872, 0.0
    %1877 = vadd.xlane.f32.xlu0 %v1876
    %v1878 = vpop.xlane.xlu0 %1877
    %v1879 = vmul.f32 %v1875, %v743
    %v1880 = vmul.f32 %v1878, %v743
    %v1881 = vadd.f32 %v1879, 1e-05
    %v1882 = vadd.f32 %v1880, 1e-05
    %v1883 = vrsqrt.pop %v1881
    %v1884 = vmul.f32 %v1883, %v1881
    %v1885 = vmul.f32 %v1884, %v1883
    %v1886 = vmul.f32 0.5, %v1885
    %v1887 = vsub.f32 1.5, %v1886
    %v1888 = vmul.f32 %v1883, %v1887
    %vm1889 = vweird.f32 %v1881
    %vm1890 = vweird.f32 %v1883
    %vm1891 = vmor %vm1889, %vm1890
    %v1892 = vsel %vm1891, %v1883, %v1888
    %v1893 = vrsqrt.pop %v1882
    %v1894 = vmul.f32 %v1893, %v1882
    %v1895 = vmul.f32 %v1894, %v1893
    %v1896 = vmul.f32 0.5, %v1895
    %v1897 = vsub.f32 1.5, %v1896
    %v1898 = vmul.f32 %v1893, %v1897
    %vm1899 = vweird.f32 %v1882
    %vm1900 = vweird.f32 %v1893
    %vm1901 = vmor %vm1899, %vm1900
    %v1902 = vsel %vm1901, %v1893, %v1898
    %v1903 = vmul.f32 %v1869, %v1892
    %v1904 = vmul.f32 %v1870, %v1902
    %v1906 = vperm.slane %v1053, 0
    %v1908 = vmul.f32 %v1903, %v1906
    %v1909 = vmul.f32 %v1904, %v1906
    %v1911 = vperm.slane %v1055, 0
    %v1913 = vadd.f32 %v1908, %v1911
    %v1914 = vadd.f32 %v1909, %v1911
    %1915 = vst.msk [vmem:[%s18] sm:$0xff] %vm128, %v1913
    %1916 = vst.msk [vmem:[%s18 + $0x8] sm:$0xff] %vm128, %v1914
    // Predicated region
    $region78: #{transformer_forward.1} parent=1 // pred_check
      _
    $region79: #{transformer_forward.1} parent=1 // pred_check_branch
      %1918 = sbr.rel (0) target = $region81
    $region80: #{transformer_forward.1} parent=1 // pred_region
      _
    $region81: #{transformer_forward.1} parent=1 // pred_fallthru
      _
    // Predicated region
    $region82: #{transformer_forward.1} parent=1 // pred_check
      _
    $region83: #{transformer_forward.1} parent=1 // pred_check_branch
      %1920 = sbr.rel (0) target = $region85
    $region84: #{transformer_forward.1} parent=1 // pred_region
      _
    $region85: #{transformer_forward.1} parent=1 // pred_fallthru
      _
    %1921 = vsyncpa [#allocation3], 1

</llo_original>
